<compile_context>
chip_gen: v7x
topology: tpu7x:2x2x1
jax: 0.10.0
libtpu: 0.0.40
codegen_flags: <defaults>
</compile_context>

<pallas_src>
import functools

import jax
import jax.numpy as jnp
from jax import lax
from jax.experimental import pallas as pl
from jax.experimental.pallas import tpu as pltpu


# ----------------------------------------------------------------------------
# Helpers
# ----------------------------------------------------------------------------
def _bf16_elementwise_ok():
    """bf16 VPU/EUP exists on v6e / v7x; keep f32 elsewhere (v5e has no bf16 EUP)."""
    try:
        kind = jax.devices()[0].device_kind.lower()
    except Exception:
        return False
    return ("v6" in kind) or ("v7" in kind) or ("tpu7" in kind)


def _choose_tile_n(n, *, cap=8192, align=256):
    """Largest lane-tile (amortizes ~0.35us/grid-step) with an EVEN step count
    >= 2 when n > align, so v7x's two TensorCores get balanced work.  VMEM is
    not the constraint (working set ~2-4 MB even at cap)."""
    if n <= align:
        return align
    steps = max(2, -(-n // cap))
    if steps % 2:
        steps += 1
    per_step = -(-n // steps)
    return min(cap, -(-per_step // align) * align)


def _param_specs(n_input, n_hidden):
    # Tiny weights/biases: full blocks, constant index_map -> VMEM-resident.
    def full(shape):
        return pl.BlockSpec(shape, lambda i: (0, 0))
    return [full((n_hidden, n_input)), full((n_hidden, 1)),
            full((n_hidden, n_hidden)), full((n_hidden, 1)),
            full((n_hidden, n_hidden)), full((n_hidden, 1)),
            full((2, n_hidden)), full((2, 1))]


# ----------------------------------------------------------------------------
# Tile-level MLP (correction_term), computed lane-dense: pairs on the lane axis.
#   x  : (tile_n, n_input)  natural layout (transpose absorbed by dot_general)
#   Wk : (out, in), bk : (out, 1)   -- PyTorch-native
#   out: (2, tile_n) f32
# ----------------------------------------------------------------------------
def _correction_tile(x, w1, b1, w2, b2, w3, b3, w4, b4, act_dtype):
    cast = (lambda a: a.astype(act_dtype)) if act_dtype != jnp.float32 else (lambda a: a)
    # Layer 1: w1 @ x.T  (trans_b contraction; no HBM transpose of del_list).
    h = lax.dot_general(w1, x, (((1,), (1,)), ((), ())),
                        preferred_element_type=jnp.float32) + b1          # (H, T)
    h = jnp.tanh(cast(h))
    h = jnp.dot(cast(w2), h, preferred_element_type=jnp.float32) + b2
    h = jnp.tanh(cast(h))
    h = jnp.dot(cast(w3), h, preferred_element_type=jnp.float32) + b3
    h = jnp.tanh(cast(h))
    return jnp.dot(cast(w4), h, preferred_element_type=jnp.float32) + b4  # (2, T) f32


def _correction_kernel(x_ref, w1, b1, w2, b2, w3, b3, w4, b4, mld_ref, *, act_dtype):
    mld = _correction_tile(x_ref[...], w1[...], b1[...], w2[...], b2[...],
                           w3[...], b3[...], w4[...], b4[...], act_dtype)
    mld_ref[...] = mld.astype(mld_ref.dtype)


def _verlet_kernel(x_ref, q_ref, p_ref, noml_ref,
                   w1, b1, w2, b2, w3, b3, w4, b4,
                   mld_ref, phalf_ref, qnext_ref, *, act_dtype, c1, c2):
    mld = _correction_tile(x_ref[...], w1[...], b1[...], w2[...], b2[...],
                           w3[...], b3[...], w4[...], b4[...], act_dtype)
    mld_ref[...] = mld.astype(mld_ref.dtype)
    # Fused velocity-verlet epilogue (first kick + drift), all lane-dense (2, T).
    p_half = p_ref[...] + c1 * (-(noml_ref[...] + mld))
    q_next = q_ref[...] + c2 * p_half
    phalf_ref[...] = p_half.astype(phalf_ref.dtype)
    qnext_ref[...] = q_next.astype(qnext_ref.dtype)


# ----------------------------------------------------------------------------
# Wrappers
# ----------------------------------------------------------------------------
@functools.partial(jax.jit, static_argnames=("tile_n", "use_bf16"))
def _correction_call(del_list, params, *, tile_n, use_bf16):
    n, n_input = del_list.shape
    n_hidden = params["w1"].shape[0]
    act_dtype = jnp.bfloat16 if use_bf16 else jnp.float32
    grid = (pl.cdiv(n, tile_n),)
    return pl.pallas_call(
        functools.partial(_correction_kernel, act_dtype=act_dtype),
        out_shape=jax.ShapeDtypeStruct((2, n), jnp.float32),
        grid_spec=pltpu.PrefetchScalarGridSpec(
            num_scalar_prefetch=0,
            grid=grid,
            in_specs=[pl.BlockSpec((tile_n, n_input), lambda i: (i, 0))]
                     + _param_specs(n_input, n_hidden),
            out_specs=pl.BlockSpec((2, tile_n), lambda i: (0, i)),
        ),
        compiler_params=pltpu.CompilerParams(dimension_semantics=("parallel",)),
    )(del_list,
      params["w1"], params["b1"], params["w2"], params["b2"],
      params["w3"], params["b3"], params["w4"], params["b4"])


def correction_term_forward(del_list, params, *, tile_n=None, use_bf16=None):
    """`self.correction_term(del_list)`.  Returns MLdHdq in lane-dense (2, N)
    layout (API contract changed per review to avoid an HBM transpose)."""
    if tile_n is None:
        tile_n = _choose_tile_n(del_list.shape[0])
    if use_bf16 is None:
        use_bf16 = _bf16_elementwise_ok()
    return _correction_call(del_list, params, tile_n=tile_n, use_bf16=use_bf16)


@functools.partial(jax.jit,
                   static_argnames=("tau", "iterations", "tile_n", "use_bf16"))
def _verlet_call(del_list, q2, p2, no_ml_dhdq2, params, *,
                 tau, iterations, tile_n, use_bf16):
    n, n_input = del_list.shape
    n_hidden = params["w1"].shape[0]
    act_dtype = jnp.bfloat16 if use_bf16 else jnp.float32
    c1 = float(tau) * float(iterations) / 2.0
    c2 = float(tau) * float(iterations)
    grid = (pl.cdiv(n, tile_n),)
    lane_spec = pl.BlockSpec((2, tile_n), lambda i: (0, i))
    return pl.pallas_call(
        functools.partial(_verlet_kernel, act_dtype=act_dtype, c1=c1, c2=c2),
        out_shape=(jax.ShapeDtypeStruct((2, n), jnp.float32),
                   jax.ShapeDtypeStruct((2, n), jnp.float32),
                   jax.ShapeDtypeStruct((2, n), jnp.float32)),
        grid_spec=pltpu.PrefetchScalarGridSpec(
            num_scalar_prefetch=0,
            grid=grid,
            in_specs=[pl.BlockSpec((tile_n, n_input), lambda i: (i, 0)),
                      lane_spec, lane_spec, lane_spec]
                     + _param_specs(n_input, n_hidden),
            out_specs=[lane_spec, lane_spec, lane_spec],
        ),
        compiler_params=pltpu.CompilerParams(dimension_semantics=("parallel",)),
    )(del_list, q2, p2, no_ml_dhdq2,
      params["w1"], params["b1"], params["w2"], params["b2"],
      params["w3"], params["b3"], params["w4"], params["b4"])


def pair_wise_mlp_forward(del_list, q2, p2, no_ml_dhdq2, params, tau, iterations,
                          *, tile_n=None, use_bf16=None):
    """Fused forward: MLdHdq = correction_term(del_list), first kick, drift.

    del_list   : (N, n_input) f32, natural layout
    q2, p2     : (2, N) f32, DIM-major state (lane-dense contract)
    no_ml_dhdq2: (2, N) f32, external Hamiltonian dHdq term
    returns    : (MLdHdq, p_half, q_next), each (2, N) f32
    """
    if tile_n is None:
        tile_n = _choose_tile_n(del_list.shape[0])
    if use_bf16 is None:
        use_bf16 = _bf16_elementwise_ok()
    return _verlet_call(del_list, q2, p2, no_ml_dhdq2, params,
                        tau=float(tau), iterations=int(iterations),
                        tile_n=tile_n, use_bf16=use_bf16)


# ----------------------------------------------------------------------------
# Deterministic parameter init (nn.Linear shapes), PyTorch-native (out, in) / (out, 1).
# ----------------------------------------------------------------------------
def init_params(key, n_input, n_hidden):
    ks = jax.random.split(key, 8)

    def linear(kw, kb, fan_in, fan_out):
        bound = 1.0 / jnp.sqrt(jnp.float32(fan_in))
        w = jax.random.uniform(kw, (fan_out, fan_in), jnp.float32, -bound, bound)
        b = jax.random.uniform(kb, (fan_out, 1), jnp.float32, -bound, bound)
        return w, b

    w1, b1 = linear(ks[0], ks[1], n_input, n_hidden)
    w2, b2 = linear(ks[2], ks[3], n_hidden, n_hidden)
    w3, b3 = linear(ks[4], ks[5], n_hidden, n_hidden)
    w4, b4 = linear(ks[6], ks[7], n_hidden, 2)
    return dict(w1=w1, b1=b1, w2=w2, b2=b2, w3=w3, b3=b3, w4=w4, b4=b4)


def reference_mlp(del_list, p):
    h = jnp.tanh(del_list @ p["w1"].T + p["b1"].T)
    h = jnp.tanh(h @ p["w2"].T + p["b2"].T)
    h = jnp.tanh(h @ p["w3"].T + p["b3"].T)
    return h @ p["w4"].T + p["b4"].T


if __name__ == "__main__":
    # TODO(synk): Hamiltonian.dHdq, phase_space.set_q/set_p, pb_q.adjust_real /
    # debug_pbc and the print/quit() control flow are external non-tensor code
    # with no Pallas equivalent; the external force term enters as an input
    # array (zeros here, as the module's dummy-momentum pass produces).
    n_pairs, n_input, n_hidden = 1000, 5, 32   # N not a multiple of 128 -> ragged tile
    tau, iterations = 0.01, 10

    key = jax.random.PRNGKey(0)
    k_param, k_del, k_q, k_p = jax.random.split(key, 4)

    params = init_params(k_param, n_input, n_hidden)
    del_list = jax.random.normal(k_del, (n_pairs, n_input), jnp.float32)
    q2 = jax.random.normal(k_q, (2, n_pairs), jnp.float32)       # DIM-major state
    p2 = jax.random.normal(k_p, (2, n_pairs), jnp.float32)
    no_ml_dhdq = jnp.zeros((2, n_pairs), jnp.float32)            # external dHdq term

    use_bf16 = _bf16_elementwise_ok()
    tol = 2e-2 if use_bf16 else 1e-4   # bf16 activations loosen agreement vs f32 ref

    # (1) correction_term alone (the nn.Sequential), lane-dense (2, N) output.
    mld_only = correction_term_forward(del_list, params, use_bf16=use_bf16)
    mld_only = jax.block_until_ready(mld_only)

    # (2) fused forward: correction MLP + first kick + drift in ONE kernel launch.
    mld, p_half, q_next = pair_wise_mlp_forward(
        del_list, q2, p2, no_ml_dhdq, params, tau, iterations, use_bf16=use_bf16)
    mld, p_half, q_next = jax.block_until_ready((mld, p_half, q_next))

    # Pure-JAX f32 reference.
    ref_mld = reference_mlp(del_list, params).T                  # (2, N)
    c1 = tau * iterations / 2.0
    c2 = tau * iterations
    ref_p_half = p2 + c1 * (-(no_ml_dhdq + ref_mld))
    ref_q_next = q2 + c2 * ref_p_half

    assert mld_only.shape == (2, n_pairs) and mld.shape == (2, n_pairs)
    assert jnp.allclose(mld_only, ref_mld, atol=tol, rtol=tol)
    assert jnp.allclose(mld, ref_mld, atol=tol, rtol=tol)
    assert jnp.allclose(p_half, ref_p_half, atol=tol, rtol=tol)
    assert jnp.allclose(q_next, ref_q_next, atol=tol, rtol=tol)

    # Second half-kick (glue): would use dHdq recomputed from q_next by the
    # external Hamiltonian (TODO above); MLdHdq is reused exactly as in the module.
    p_next = p_half + c1 * (-(jnp.zeros_like(mld) + mld))
    jax.block_until_ready((q_next, p_next))

    print("KERNEL_OK")
</pallas_src>

<mosaic_0001>
module attributes {stable_mosaic.version = 11 : i64} {
  func.func @_correction_kernel(%arg0: i32, %arg1: memref<512x5xf32, #tpu.memory_space<vmem>>, %arg2: memref<32x5xf32, #tpu.memory_space<vmem>>, %arg3: memref<32x1xf32, #tpu.memory_space<vmem>>, %arg4: memref<32x32xf32, #tpu.memory_space<vmem>>, %arg5: memref<32x1xf32, #tpu.memory_space<vmem>>, %arg6: memref<32x32xf32, #tpu.memory_space<vmem>>, %arg7: memref<32x1xf32, #tpu.memory_space<vmem>>, %arg8: memref<2x32xf32, #tpu.memory_space<vmem>>, %arg9: memref<2x1xf32, #tpu.memory_space<vmem>>, %arg10: memref<2x512xf32, #tpu.memory_space<vmem>>) attributes {dimension_semantics = [#tpu.dimension_semantics<parallel>], iteration_bounds = array<i64: 2>, scalar_prefetch = 0 : i64, scratch_operands = 0 : i64, tpu.core_type = #tpu.core_type<tc>, window_params = [{transform_indices = @transform_0, window_bounds = array<i64: 512, 5>}, {pipeline_mode = #tpu.pipeline_mode<synchronous>, transform_indices = @transform_1, window_bounds = array<i64: 32, 5>}, {pipeline_mode = #tpu.pipeline_mode<synchronous>, transform_indices = @transform_2, window_bounds = array<i64: 32, 1>}, {pipeline_mode = #tpu.pipeline_mode<synchronous>, transform_indices = @transform_3, window_bounds = array<i64: 32, 32>}, {pipeline_mode = #tpu.pipeline_mode<synchronous>, transform_indices = @transform_4, window_bounds = array<i64: 32, 1>}, {pipeline_mode = #tpu.pipeline_mode<synchronous>, transform_indices = @transform_5, window_bounds = array<i64: 32, 32>}, {pipeline_mode = #tpu.pipeline_mode<synchronous>, transform_indices = @transform_6, window_bounds = array<i64: 32, 1>}, {pipeline_mode = #tpu.pipeline_mode<synchronous>, transform_indices = @transform_7, window_bounds = array<i64: 2, 32>}, {pipeline_mode = #tpu.pipeline_mode<synchronous>, transform_indices = @transform_8, window_bounds = array<i64: 2, 1>}, {transform_indices = @transform_9, window_bounds = array<i64: 2, 512>}]} {
    %c0 = arith.constant 0 : index
    %c0_0 = arith.constant 0 : index
    %0 = vector.load %arg1[%c0, %c0_0] : memref<512x5xf32, #tpu.memory_space<vmem>>, vector<512x5xf32>
    %c0_1 = arith.constant 0 : index
    %c0_2 = arith.constant 0 : index
    %1 = vector.load %arg2[%c0_1, %c0_2] : memref<32x5xf32, #tpu.memory_space<vmem>>, vector<32x5xf32>
    %c0_3 = arith.constant 0 : index
    %c0_4 = arith.constant 0 : index
    %2 = vector.load %arg3[%c0_3, %c0_4] : memref<32x1xf32, #tpu.memory_space<vmem>>, vector<32x1xf32>
    %c0_5 = arith.constant 0 : index
    %c0_6 = arith.constant 0 : index
    %3 = vector.load %arg4[%c0_5, %c0_6] : memref<32x32xf32, #tpu.memory_space<vmem>>, vector<32x32xf32>
    %c0_7 = arith.constant 0 : index
    %c0_8 = arith.constant 0 : index
    %4 = vector.load %arg5[%c0_7, %c0_8] : memref<32x1xf32, #tpu.memory_space<vmem>>, vector<32x1xf32>
    %c0_9 = arith.constant 0 : index
    %c0_10 = arith.constant 0 : index
    %5 = vector.load %arg6[%c0_9, %c0_10] : memref<32x32xf32, #tpu.memory_space<vmem>>, vector<32x32xf32>
    %c0_11 = arith.constant 0 : index
    %c0_12 = arith.constant 0 : index
    %6 = vector.load %arg7[%c0_11, %c0_12] : memref<32x1xf32, #tpu.memory_space<vmem>>, vector<32x1xf32>
    %c0_13 = arith.constant 0 : index
    %c0_14 = arith.constant 0 : index
    %7 = vector.load %arg8[%c0_13, %c0_14] : memref<2x32xf32, #tpu.memory_space<vmem>>, vector<2x32xf32>
    %c0_15 = arith.constant 0 : index
    %c0_16 = arith.constant 0 : index
    %8 = vector.load %arg9[%c0_15, %c0_16] : memref<2x1xf32, #tpu.memory_space<vmem>>, vector<2x1xf32>
    %cst = arith.constant dense<0.000000e+00> : vector<32x512xf32>
    %9 = tpu.matmul %1, %0, %cst {dimension_numbers = #tpu.dot_dimension_numbers<[1], [1], [0], [0], [0, 0, 1, 0], [], []>} : vector<32x5xf32>, vector<512x5xf32>, vector<32x512xf32> -> vector<32x512xf32>
    %10 = vector.broadcast %2 : vector<32x1xf32> to vector<32x512xf32>
    %11 = arith.addf %9, %10 : vector<32x512xf32>
    %12 = math.tanh %11 : vector<32x512xf32>
    %cst_17 = arith.constant dense<0.000000e+00> : vector<32x512xf32>
    %13 = tpu.matmul %3, %12, %cst_17 {dimension_numbers = #tpu.dot_dimension_numbers<[1], [0], [0], [1], [0, 0, 1, 1], [], []>} : vector<32x32xf32>, vector<32x512xf32>, vector<32x512xf32> -> vector<32x512xf32>
    %14 = vector.broadcast %4 : vector<32x1xf32> to vector<32x512xf32>
    %15 = arith.addf %13, %14 : vector<32x512xf32>
    %16 = math.tanh %15 : vector<32x512xf32>
    %cst_18 = arith.constant dense<0.000000e+00> : vector<32x512xf32>
    %17 = tpu.matmul %5, %16, %cst_18 {dimension_numbers = #tpu.dot_dimension_numbers<[1], [0], [0], [1], [0, 0, 1, 1], [], []>} : vector<32x32xf32>, vector<32x512xf32>, vector<32x512xf32> -> vector<32x512xf32>
    %18 = vector.broadcast %6 : vector<32x1xf32> to vector<32x512xf32>
    %19 = arith.addf %17, %18 : vector<32x512xf32>
    %20 = math.tanh %19 : vector<32x512xf32>
    %cst_19 = arith.constant dense<0.000000e+00> : vector<2x512xf32>
    %21 = tpu.matmul %7, %20, %cst_19 {dimension_numbers = #tpu.dot_dimension_numbers<[1], [0], [0], [1], [0, 0, 1, 1], [], []>} : vector<2x32xf32>, vector<32x512xf32>, vector<2x512xf32> -> vector<2x512xf32>
    %22 = vector.broadcast %8 : vector<2x1xf32> to vector<2x512xf32>
    %23 = arith.addf %21, %22 : vector<2x512xf32>
    %c0_20 = arith.constant 0 : index
    %c0_21 = arith.constant 0 : index
    %24 = vector.load %arg10[%c0_20, %c0_21] : memref<2x512xf32, #tpu.memory_space<vmem>>, vector<2x512xf32>
    tpu.vector_store %arg10[%c0_20, %c0_21], %23 {strides = array<i32>} : memref<2x512xf32, #tpu.memory_space<vmem>>, vector<2x512xf32>,
    return
  }
  func.func @transform_0(%arg0: i32) -> (i32, i32) {
    %c0_i32 = arith.constant 0 : i32
    %c0_i32_0 = arith.constant 0 : i32
    return %arg0, %c0_i32 : i32, i32
  }
  func.func @transform_1(%arg0: i32) -> (i32, i32) {
    %c0_i32 = arith.constant 0 : i32
    %c0_i32_0 = arith.constant 0 : i32
    %c0_i32_1 = arith.constant 0 : i32
    return %c0_i32, %c0_i32_0 : i32, i32
  }
  func.func @transform_2(%arg0: i32) -> (i32, i32) {
    %c0_i32 = arith.constant 0 : i32
    %c0_i32_0 = arith.constant 0 : i32
    %c0_i32_1 = arith.constant 0 : i32
    return %c0_i32, %c0_i32_0 : i32, i32
  }
  func.func @transform_3(%arg0: i32) -> (i32, i32) {
    %c0_i32 = arith.constant 0 : i32
    %c0_i32_0 = arith.constant 0 : i32
    %c0_i32_1 = arith.constant 0 : i32
    return %c0_i32, %c0_i32_0 : i32, i32
  }
  func.func @transform_4(%arg0: i32) -> (i32, i32) {
    %c0_i32 = arith.constant 0 : i32
    %c0_i32_0 = arith.constant 0 : i32
    %c0_i32_1 = arith.constant 0 : i32
    return %c0_i32, %c0_i32_0 : i32, i32
  }
  func.func @transform_5(%arg0: i32) -> (i32, i32) {
    %c0_i32 = arith.constant 0 : i32
    %c0_i32_0 = arith.constant 0 : i32
    %c0_i32_1 = arith.constant 0 : i32
    return %c0_i32, %c0_i32_0 : i32, i32
  }
  func.func @transform_6(%arg0: i32) -> (i32, i32) {
    %c0_i32 = arith.constant 0 : i32
    %c0_i32_0 = arith.constant 0 : i32
    %c0_i32_1 = arith.constant 0 : i32
    return %c0_i32, %c0_i32_0 : i32, i32
  }
  func.func @transform_7(%arg0: i32) -> (i32, i32) {
    %c0_i32 = arith.constant 0 : i32
    %c0_i32_0 = arith.constant 0 : i32
    %c0_i32_1 = arith.constant 0 : i32
    return %c0_i32, %c0_i32_0 : i32, i32
  }
  func.func @transform_8(%arg0: i32) -> (i32, i32) {
    %c0_i32 = arith.constant 0 : i32
    %c0_i32_0 = arith.constant 0 : i32
    %c0_i32_1 = arith.constant 0 : i32
    return %c0_i32, %c0_i32_0 : i32, i32
  }
  func.func @transform_9(%arg0: i32) -> (i32, i32) {
    %c0_i32 = arith.constant 0 : i32
    %c0_i32_0 = arith.constant 0 : i32
    return %c0_i32, %arg0 : i32, i32
  }
}

</mosaic_0001>

<llo_original>
// kernel: _correction_call.1
$region0: #{_correction_call.1}
  #allocation0 [shape = 'u32[]', space=smem, size = 0x4, offset = 0x4, fixed_abs, tag = 'smem constant byte address 0x4 - core index']
  #allocation1 [shape = 'u32[144,128]{1,0:T(1,128)}', space=vmem, size = 0x12000, scoped, tag = 'internal scratch']
  %s0 = inlined_call_operand.vmem [shape: f32[1000,5], index: 0, kind: input, shape index: {}]
  %s1 = inlined_call_operand.vmem [shape: f32[32,5], index: 1, kind: input, shape index: {}]
  %s2 = inlined_call_operand.vmem [shape: f32[32,1], index: 2, kind: input, shape index: {}]
  %s3 = inlined_call_operand.vmem [shape: f32[32,32], index: 3, kind: input, shape index: {}]
  %s4 = inlined_call_operand.vmem [shape: f32[32,1], index: 4, kind: input, shape index: {}]
  %s5 = inlined_call_operand.vmem [shape: f32[32,32], index: 5, kind: input, shape index: {}]
  %s6 = inlined_call_operand.vmem [shape: f32[32,1], index: 6, kind: input, shape index: {}]
  %s7 = inlined_call_operand.vmem [shape: f32[2,32], index: 7, kind: input, shape index: {}]
  %s8 = inlined_call_operand.vmem [shape: f32[2,1], index: 8, kind: input, shape index: {}]
  %s9 = inlined_call_operand.hbm [shape: f32[2,1000], index: 9, kind: output, shape index: {}]
  %s10 = sld [smem:[#allocation0]]
  $region69: #{_correction_call.1} parent=0
    _
  %s12 = ssub.s32 1, %s10
  %s13 = scalar_select 0, %s12, %s10
  $region1: #{_correction_call.1} parent=0
    #allocation2 [shape = 'u8[8192]{0}', space=vmem, size = 0x2000, scoped, tag = 'output window, operand 0']
    #allocation3 [shape = 's32[2]{0}', space=sflag, size = 0x8, scoped, tag = 'scoped memory for _correction_call.1']
    %14 = vsyncpa [#allocation3], 0
    %s15 = scalar_lea.sflag [#allocation3], 1
    %16 = vsyncpa %s15, 0
    loop: start=0, step=1, limit=4
    $region2: #{_correction_call.1} parent=1 // loop_pre_header
      _
    $region3: #{_correction_call.1} parent=1 // loop_header
      %s18 = sphi 0, %s22
      %p19 = scmp.ge.s32.totalorder %s18, 4
      %s28 = sphi 0, %s30
      %s31 = sphi 0, %s28
      %s32 = sphi 0, %s31
      %s48 = sphi 0, %s32
      %s52 = sphi 0, %s52
      %s54 = sphi 0, %s52
      %s55 = sphi 0, %s54
      %s69 = sphi 0, %s55
      %s73 = sphi 0, %s73
      %s75 = sphi 0, %s73
      %s76 = sphi 0, %s75
      %s90 = sphi 0, %s76
      %s94 = sphi 0, %s94
      %s96 = sphi 0, %s94
      %s97 = sphi 0, %s96
      %s111 = sphi 0, %s97
      %s115 = sphi 0, %s115
      %s117 = sphi 0, %s115
      %s118 = sphi 0, %s117
      %s132 = sphi 0, %s118
      %s136 = sphi 0, %s136
      %s138 = sphi 0, %s136
      %s139 = sphi 0, %s138
      %s153 = sphi 0, %s139
      %s157 = sphi 0, %s157
      %s159 = sphi 0, %s157
      %s160 = sphi 0, %s159
      %s174 = sphi 0, %s160
      %s178 = sphi 0, %s178
      %s180 = sphi 0, %s178
      %s181 = sphi 0, %s180
      %s195 = sphi 0, %s181
      %s199 = sphi 0, %s199
      %s201 = sphi 0, %s199
      %s202 = sphi 0, %s201
      %s216 = sphi 0, %s202
      %s222 = sphi 0, %s224
      %s225 = sphi 0, %s222
      %s226 = sphi 0, %s225
      %s242 = sphi 0, %s226
    $region4: #{_correction_call.1} parent=1 // loop_header_branch
      %21 = sbr.rel (%p19) target = $region8
    $region5: #{_correction_call.1} parent=1 // loop_body
      %s23 = ssub.s32 %s18, 1
      %s24 = ssub.s32 %s18, 2
      %s25 = sadd.s32 %s18, 1
      %s26 = ssub.s32 %s18, %s25
      %p27 = scmp.eq.s32.totalorder %s26, 0
      %s29 = sadd.s32 %s28, 1
      %s30 = scalar_select %p27, %s28, %s29
      %p33 = pneg %p27
      %p34 = scmp.eq.s32.totalorder %s18, 1
      %p35 = por %p33, %p34
      %p36 = scmp.ne.s32.totalorder %s28, %s31
      %p37 = scmp.eq.s32.totalorder %s18, 0
      %p38 = por %p36, %p37
      %p39 = scmp.ne.s32.totalorder %s28, %s31
      %p40 = scmp.eq.s32.totalorder %s23, 1
      %p41 = por %p39, %p40
      %p42 = scmp.ne.s32.totalorder %s31, %s32
      %p43 = scmp.eq.s32.totalorder %s23, 0
      %p44 = por %p42, %p43
      %p45 = scmp.ne.s32.totalorder %s31, %s32
      %p46 = scmp.eq.s32.totalorder %s24, 1
      %p47 = por %p45, %p46
      %p49 = scmp.ne.s32.totalorder %s32, %s48
      %p50 = scmp.eq.s32.totalorder %s24, 0
      %p51 = por %p49, %p50
      %s53 = sadd.s32 %s52, 1
      %p56 = scmp.eq.s32.totalorder %s18, 1
      %p57 = scmp.ne.s32.totalorder %s52, %s54
      %p58 = scmp.eq.s32.totalorder %s18, 0
      %p59 = por %p57, %p58
      %p60 = scmp.ne.s32.totalorder %s52, %s54
      %p61 = scmp.eq.s32.totalorder %s23, 1
      %p62 = por %p60, %p61
      %p63 = scmp.ne.s32.totalorder %s54, %s55
      %p64 = scmp.eq.s32.totalorder %s23, 0
      %p65 = por %p63, %p64
      %p66 = scmp.ne.s32.totalorder %s54, %s55
      %p67 = scmp.eq.s32.totalorder %s24, 1
      %p68 = por %p66, %p67
      %p70 = scmp.ne.s32.totalorder %s55, %s69
      %p71 = scmp.eq.s32.totalorder %s24, 0
      %p72 = por %p70, %p71
      %s74 = sadd.s32 %s73, 1
      %p77 = scmp.eq.s32.totalorder %s18, 1
      %p78 = scmp.ne.s32.totalorder %s73, %s75
      %p79 = scmp.eq.s32.totalorder %s18, 0
      %p80 = por %p78, %p79
      %p81 = scmp.ne.s32.totalorder %s73, %s75
      %p82 = scmp.eq.s32.totalorder %s23, 1
      %p83 = por %p81, %p82
      %p84 = scmp.ne.s32.totalorder %s75, %s76
      %p85 = scmp.eq.s32.totalorder %s23, 0
      %p86 = por %p84, %p85
      %p87 = scmp.ne.s32.totalorder %s75, %s76
      %p88 = scmp.eq.s32.totalorder %s24, 1
      %p89 = por %p87, %p88
      %p91 = scmp.ne.s32.totalorder %s76, %s90
      %p92 = scmp.eq.s32.totalorder %s24, 0
      %p93 = por %p91, %p92
      %s95 = sadd.s32 %s94, 1
      %p98 = scmp.eq.s32.totalorder %s18, 1
      %p99 = scmp.ne.s32.totalorder %s94, %s96
      %p100 = scmp.eq.s32.totalorder %s18, 0
      %p101 = por %p99, %p100
      %p102 = scmp.ne.s32.totalorder %s94, %s96
      %p103 = scmp.eq.s32.totalorder %s23, 1
      %p104 = por %p102, %p103
      %p105 = scmp.ne.s32.totalorder %s96, %s97
      %p106 = scmp.eq.s32.totalorder %s23, 0
      %p107 = por %p105, %p106
      %p108 = scmp.ne.s32.totalorder %s96, %s97
      %p109 = scmp.eq.s32.totalorder %s24, 1
      %p110 = por %p108, %p109
      %p112 = scmp.ne.s32.totalorder %s97, %s111
      %p113 = scmp.eq.s32.totalorder %s24, 0
      %p114 = por %p112, %p113
      %s116 = sadd.s32 %s115, 1
      %p119 = scmp.eq.s32.totalorder %s18, 1
      %p120 = scmp.ne.s32.totalorder %s115, %s117
      %p121 = scmp.eq.s32.totalorder %s18, 0
      %p122 = por %p120, %p121
      %p123 = scmp.ne.s32.totalorder %s115, %s117
      %p124 = scmp.eq.s32.totalorder %s23, 1
      %p125 = por %p123, %p124
      %p126 = scmp.ne.s32.totalorder %s117, %s118
      %p127 = scmp.eq.s32.totalorder %s23, 0
      %p128 = por %p126, %p127
      %p129 = scmp.ne.s32.totalorder %s117, %s118
      %p130 = scmp.eq.s32.totalorder %s24, 1
      %p131 = por %p129, %p130
      %p133 = scmp.ne.s32.totalorder %s118, %s132
      %p134 = scmp.eq.s32.totalorder %s24, 0
      %p135 = por %p133, %p134
      %s137 = sadd.s32 %s136, 1
      %p140 = scmp.eq.s32.totalorder %s18, 1
      %p141 = scmp.ne.s32.totalorder %s136, %s138
      %p142 = scmp.eq.s32.totalorder %s18, 0
      %p143 = por %p141, %p142
      %p144 = scmp.ne.s32.totalorder %s136, %s138
      %p145 = scmp.eq.s32.totalorder %s23, 1
      %p146 = por %p144, %p145
      %p147 = scmp.ne.s32.totalorder %s138, %s139
      %p148 = scmp.eq.s32.totalorder %s23, 0
      %p149 = por %p147, %p148
      %p150 = scmp.ne.s32.totalorder %s138, %s139
      %p151 = scmp.eq.s32.totalorder %s24, 1
      %p152 = por %p150, %p151
      %p154 = scmp.ne.s32.totalorder %s139, %s153
      %p155 = scmp.eq.s32.totalorder %s24, 0
      %p156 = por %p154, %p155
      %s158 = sadd.s32 %s157, 1
      %p161 = scmp.eq.s32.totalorder %s18, 1
      %p162 = scmp.ne.s32.totalorder %s157, %s159
      %p163 = scmp.eq.s32.totalorder %s18, 0
      %p164 = por %p162, %p163
      %p165 = scmp.ne.s32.totalorder %s157, %s159
      %p166 = scmp.eq.s32.totalorder %s23, 1
      %p167 = por %p165, %p166
      %p168 = scmp.ne.s32.totalorder %s159, %s160
      %p169 = scmp.eq.s32.totalorder %s23, 0
      %p170 = por %p168, %p169
      %p171 = scmp.ne.s32.totalorder %s159, %s160
      %p172 = scmp.eq.s32.totalorder %s24, 1
      %p173 = por %p171, %p172
      %p175 = scmp.ne.s32.totalorder %s160, %s174
      %p176 = scmp.eq.s32.totalorder %s24, 0
      %p177 = por %p175, %p176
      %s179 = sadd.s32 %s178, 1
      %p182 = scmp.eq.s32.totalorder %s18, 1
      %p183 = scmp.ne.s32.totalorder %s178, %s180
      %p184 = scmp.eq.s32.totalorder %s18, 0
      %p185 = por %p183, %p184
      %p186 = scmp.ne.s32.totalorder %s178, %s180
      %p187 = scmp.eq.s32.totalorder %s23, 1
      %p188 = por %p186, %p187
      %p189 = scmp.ne.s32.totalorder %s180, %s181
      %p190 = scmp.eq.s32.totalorder %s23, 0
      %p191 = por %p189, %p190
      %p192 = scmp.ne.s32.totalorder %s180, %s181
      %p193 = scmp.eq.s32.totalorder %s24, 1
      %p194 = por %p192, %p193
      %p196 = scmp.ne.s32.totalorder %s181, %s195
      %p197 = scmp.eq.s32.totalorder %s24, 0
      %p198 = por %p196, %p197
      %s200 = sadd.s32 %s199, 1
      %p203 = scmp.eq.s32.totalorder %s18, 1
      %p204 = scmp.ne.s32.totalorder %s199, %s201
      %p205 = scmp.eq.s32.totalorder %s18, 0
      %p206 = por %p204, %p205
      %p207 = scmp.ne.s32.totalorder %s199, %s201
      %p208 = scmp.eq.s32.totalorder %s23, 1
      %p209 = por %p207, %p208
      %p210 = scmp.ne.s32.totalorder %s201, %s202
      %p211 = scmp.eq.s32.totalorder %s23, 0
      %p212 = por %p210, %p211
      %p213 = scmp.ne.s32.totalorder %s201, %s202
      %p214 = scmp.eq.s32.totalorder %s24, 1
      %p215 = por %p213, %p214
      %p217 = scmp.ne.s32.totalorder %s202, %s216
      %p218 = scmp.eq.s32.totalorder %s24, 0
      %p219 = por %p217, %p218
      %s220 = ssub.s32 %s18, %s25
      %p221 = scmp.eq.s32.totalorder %s220, 0
      %s223 = sadd.s32 %s222, 1
      %s224 = scalar_select %p221, %s222, %s223
      %p227 = pneg %p221
      %p228 = scmp.eq.s32.totalorder %s18, 1
      %p229 = por %p227, %p228
      %p230 = scmp.ne.s32.totalorder %s222, %s225
      %p231 = scmp.eq.s32.totalorder %s18, 0
      %p232 = por %p230, %p231
      %p233 = scmp.ne.s32.totalorder %s222, %s225
      %p234 = scmp.eq.s32.totalorder %s23, 1
      %p235 = por %p233, %p234
      %p236 = scmp.ne.s32.totalorder %s225, %s226
      %p237 = scmp.eq.s32.totalorder %s23, 0
      %p238 = por %p236, %p237
      %p239 = scmp.ne.s32.totalorder %s225, %s226
      %p240 = scmp.eq.s32.totalorder %s24, 1
      %p241 = por %p239, %p240
      %p243 = scmp.ne.s32.totalorder %s226, %s242
      %p244 = scmp.eq.s32.totalorder %s24, 0
      %p245 = por %p243, %p244
      %p246 = scmp.le.s32.totalorder 1, %s18
      %p247 = scmp.lt.s32.totalorder %s18, 3
      %p248 = pnand %p246, %p247
      %p249 = pneg %p248
      // Predicated region
      $region9: #{_correction_call.1} parent=5 // pred_check
        _
      $region10: #{_correction_call.1} parent=5 // pred_check_branch
        %251 = sbr.rel (%p248) target = $region12
      $region11: #{_correction_call.1} parent=5 // pred_region
        %s252 = ssub.s32 %s18, 1
        // Predicated region
        $region13: #{_correction_call.1} parent=11 // pred_check
          %p253 = pneg %p65
        $region14: #{_correction_call.1} parent=11 // pred_check_branch
          %255 = sbr.rel (%p253) target = $region16
        $region15: #{_correction_call.1} parent=11 // pred_region
          _
        $region16: #{_correction_call.1} parent=11 // pred_fallthru
          _
        // Predicated region
        $region17: #{_correction_call.1} parent=11 // pred_check
          %p256 = pneg %p86
        $region18: #{_correction_call.1} parent=11 // pred_check_branch
          %258 = sbr.rel (%p256) target = $region20
        $region19: #{_correction_call.1} parent=11 // pred_region
          _
        $region20: #{_correction_call.1} parent=11 // pred_fallthru
          _
        // Predicated region
        $region21: #{_correction_call.1} parent=11 // pred_check
          %p259 = pneg %p107
        $region22: #{_correction_call.1} parent=11 // pred_check_branch
          %261 = sbr.rel (%p259) target = $region24
        $region23: #{_correction_call.1} parent=11 // pred_region
          _
        $region24: #{_correction_call.1} parent=11 // pred_fallthru
          _
        // Predicated region
        $region25: #{_correction_call.1} parent=11 // pred_check
          %p262 = pneg %p128
        $region26: #{_correction_call.1} parent=11 // pred_check_branch
          %264 = sbr.rel (%p262) target = $region28
        $region27: #{_correction_call.1} parent=11 // pred_region
          _
        $region28: #{_correction_call.1} parent=11 // pred_fallthru
          _
        // Predicated region
        $region29: #{_correction_call.1} parent=11 // pred_check
          %p265 = pneg %p149
        $region30: #{_correction_call.1} parent=11 // pred_check_branch
          %267 = sbr.rel (%p265) target = $region32
        $region31: #{_correction_call.1} parent=11 // pred_region
          _
        $region32: #{_correction_call.1} parent=11 // pred_fallthru
          _
        // Predicated region
        $region33: #{_correction_call.1} parent=11 // pred_check
          %p268 = pneg %p170
        $region34: #{_correction_call.1} parent=11 // pred_check_branch
          %270 = sbr.rel (%p268) target = $region36
        $region35: #{_correction_call.1} parent=11 // pred_region
          _
        $region36: #{_correction_call.1} parent=11 // pred_fallthru
          _
        // Predicated region
        $region37: #{_correction_call.1} parent=11 // pred_check
          %p271 = pneg %p191
        $region38: #{_correction_call.1} parent=11 // pred_check_branch
          %273 = sbr.rel (%p271) target = $region40
        $region39: #{_correction_call.1} parent=11 // pred_region
          _
        $region40: #{_correction_call.1} parent=11 // pred_fallthru
          _
        // Predicated region
        $region41: #{_correction_call.1} parent=11 // pred_check
          %p274 = pneg %p212
        $region42: #{_correction_call.1} parent=11 // pred_check_branch
          %276 = sbr.rel (%p274) target = $region44
        $region43: #{_correction_call.1} parent=11 // pred_region
          _
        $region44: #{_correction_call.1} parent=11 // pred_fallthru
          _
      $region12: #{_correction_call.1} parent=5 // pred_fallthru
        _
      %p277 = scmp.lt.s32.totalorder %s18, 2
      // Predicated region
      $region45: #{_correction_call.1} parent=5 // pred_check
        %p278 = pneg %p277
      $region46: #{_correction_call.1} parent=5 // pred_check_branch
        %280 = sbr.rel (%p278) target = $region48
      $region47: #{_correction_call.1} parent=5 // pred_region
        // Predicated region
        $region49: #{_correction_call.1} parent=47 // pred_check
          %p281 = pneg %p38
        $region50: #{_correction_call.1} parent=47 // pred_check_branch
          %283 = sbr.rel (%p281) target = $region52
        $region51: #{_correction_call.1} parent=47 // pred_region
          %s284 = smul.u32 64, %s18
          %s285 = ssub.s32 125, %s284
          %p286 = scmp.lt.s32.totalorder %s285, 64
          %s287 = scalar_select %p286, %s285, 64
          %s288 = smul.u32 128, %s287
          %p289 = scmp.lt.s32.totalorder %s284, 124
          %s290 = scalar_select %p289, %s284, 124
          %s291 = smul.addr %s290, 8
          %s292 = scalar_lea.vmem %s0, %s291
          %s293 = smul.u32 64, %s18
          %s294 = ssub.s32 125, %s293
          %p295 = scmp.lt.s32.totalorder %s294, 64
          %s296 = scalar_select %p295, %s294, 64
          %s297 = smul.u32 128, %s296
        $region52: #{_correction_call.1} parent=47 // pred_fallthru
          _
      $region48: #{_correction_call.1} parent=5 // pred_fallthru
        _
      %p298 = scmp.le.s32.totalorder 1, %s18
      %p299 = scmp.lt.s32.totalorder %s18, 3
      %p300 = pnand %p298, %p299
      %p301 = pneg %p300
      // Predicated region
      $region53: #{_correction_call.1} parent=5 // pred_check
        _
      $region54: #{_correction_call.1} parent=5 // pred_check_branch
        %303 = sbr.rel (%p300) target = $region56
      $region55: #{_correction_call.1} parent=5 // pred_region
        %s304 = ssub.s32 %s18, 1
        %s305 = smul.u32 64, %s23
        %s306 = ssub.s32 125, %s305
        %p307 = scmp.lt.s32.totalorder %s306, 64
        %s308 = scalar_select %p307, %s306, 64
        %s309 = smul.u32 128, %s308
        %p310 = scmp.lt.s32.totalorder %s305, 124
        %s311 = scalar_select %p310, %s305, 124
        %s312 = smul.addr %s311, 8
        %s313 = scalar_lea.vmem %s0, %s312
        %p314 = pneg %p44
        %p315 = pneg %p41
        %p316 = pneg %p65
        %p317 = pneg %p62
        %p318 = pneg %p86
        %p319 = pneg %p83
        %p320 = pneg %p107
        %p321 = pneg %p104
        %p322 = pneg %p128
        %p323 = pneg %p125
        %p324 = pneg %p149
        %p325 = pneg %p146
        %p326 = pneg %p170
        %p327 = pneg %p167
        %p328 = pneg %p191
        %p329 = pneg %p188
        %p330 = pneg %p212
        %p331 = pneg %p209
        %p332 = pneg %p238
        %p333 = pneg %p235
        %s334 = sand.u32 %s225, 1
        %s335 = scalar_lea.sflag [#allocation3], %s334
        %s336 = sand.u32 %s225, 1
        %s337 = smul.addr %s336, 8
        %s338 = scalar_lea.vmem [#allocation2], %s337
        %s339 = smul.u32 64, %s23
        %s340 = ssub.s32 125, %s339
        %p341 = scmp.lt.s32.totalorder %s340, 64
        %s342 = scalar_select %p341, %s340, 64
        %s343 = smul.u32 128, %s342
        %p344 = scmp.lt.s32.totalorder %s339, 124
        %s345 = scalar_select %p344, %s339, 124
        %s346 = smul.addr %s345, 8
        %s347 = scalar_lea.vmem %s0, %s346
        %s348 = smul.u32 64, %s23
        %s349 = ssub.s32 125, %s348
        %p350 = scmp.lt.s32.totalorder %s349, 64
        %s351 = scalar_select %p350, %s349, 64
        %s352 = smul.u32 128, %s351
        %s353 = smul.u32 4, %s23
        %v354 = vld [vmem:[%s347] sm:$0xff]
        %v355 = vld [vmem:[%s347 + $0x8] sm:$0xff]
        %v356 = vld [vmem:[%s347 + $0x10] sm:$0xff]
        %v357 = vld [vmem:[%s347 + $0x18] sm:$0xff]
        %v358 = vld [vmem:[%s347 + $0x20] sm:$0xff]
        %v359 = vld [vmem:[%s347 + $0x28] sm:$0xff]
        %v360 = vld [vmem:[%s347 + $0x30] sm:$0xff]
        %v361 = vld [vmem:[%s347 + $0x38] sm:$0xff]
        %v362 = vld [vmem:[%s347 + $0x40] sm:$0xff]
        %v363 = vld [vmem:[%s347 + $0x48] sm:$0xff]
        %v364 = vld [vmem:[%s347 + $0x50] sm:$0xff]
        %v365 = vld [vmem:[%s347 + $0x58] sm:$0xff]
        %v366 = vld [vmem:[%s347 + $0x60] sm:$0xff]
        %v367 = vld [vmem:[%s347 + $0x68] sm:$0xff]
        %v368 = vld [vmem:[%s347 + $0x70] sm:$0xff]
        %v369 = vld [vmem:[%s347 + $0x78] sm:$0xff]
        %v370 = vld [vmem:[%s347 + $0x80] sm:$0xff]
        %v371 = vld [vmem:[%s347 + $0x88] sm:$0xff]
        %v372 = vld [vmem:[%s347 + $0x90] sm:$0xff]
        %v373 = vld [vmem:[%s347 + $0x98] sm:$0xff]
        %v374 = vld [vmem:[%s347 + $0xa0] sm:$0xff]
        %v375 = vld [vmem:[%s347 + $0xa8] sm:$0xff]
        %v376 = vld [vmem:[%s347 + $0xb0] sm:$0xff]
        %v377 = vld [vmem:[%s347 + $0xb8] sm:$0xff]
        %v378 = vld [vmem:[%s347 + $0xc0] sm:$0xff]
        %v379 = vld [vmem:[%s347 + $0xc8] sm:$0xff]
        %v380 = vld [vmem:[%s347 + $0xd0] sm:$0xff]
        %v381 = vld [vmem:[%s347 + $0xd8] sm:$0xff]
        %v382 = vld [vmem:[%s347 + $0xe0] sm:$0xff]
        %v383 = vld [vmem:[%s347 + $0xe8] sm:$0xff]
        %v384 = vld [vmem:[%s347 + $0xf0] sm:$0xff]
        %v385 = vld [vmem:[%s347 + $0xf8] sm:$0xff]
        %v386 = vld [vmem:[%s347 + $0x100] sm:$0xff]
        %v387 = vld [vmem:[%s347 + $0x108] sm:$0xff]
        %v388 = vld [vmem:[%s347 + $0x110] sm:$0xff]
        %v389 = vld [vmem:[%s347 + $0x118] sm:$0xff]
        %v390 = vld [vmem:[%s347 + $0x120] sm:$0xff]
        %v391 = vld [vmem:[%s347 + $0x128] sm:$0xff]
        %v392 = vld [vmem:[%s347 + $0x130] sm:$0xff]
        %v393 = vld [vmem:[%s347 + $0x138] sm:$0xff]
        %v394 = vld [vmem:[%s347 + $0x140] sm:$0xff]
        %v395 = vld [vmem:[%s347 + $0x148] sm:$0xff]
        %v396 = vld [vmem:[%s347 + $0x150] sm:$0xff]
        %v397 = vld [vmem:[%s347 + $0x158] sm:$0xff]
        %v398 = vld [vmem:[%s347 + $0x160] sm:$0xff]
        %v399 = vld [vmem:[%s347 + $0x168] sm:$0xff]
        %v400 = vld [vmem:[%s347 + $0x170] sm:$0xff]
        %v401 = vld [vmem:[%s347 + $0x178] sm:$0xff]
        %v402 = vld [vmem:[%s347 + $0x180] sm:$0xff]
        %v403 = vld [vmem:[%s347 + $0x188] sm:$0xff]
        %v404 = vld [vmem:[%s347 + $0x190] sm:$0xff]
        %v405 = vld [vmem:[%s347 + $0x198] sm:$0xff]
        %v406 = vld [vmem:[%s347 + $0x1a0] sm:$0xff]
        %v407 = vld [vmem:[%s347 + $0x1a8] sm:$0xff]
        %v408 = vld [vmem:[%s347 + $0x1b0] sm:$0xff]
        %v409 = vld [vmem:[%s347 + $0x1b8] sm:$0xff]
        %v410 = vld [vmem:[%s347 + $0x1c0] sm:$0xff]
        %v411 = vld [vmem:[%s347 + $0x1c8] sm:$0xff]
        %v412 = vld [vmem:[%s347 + $0x1d0] sm:$0xff]
        %v413 = vld [vmem:[%s347 + $0x1d8] sm:$0xff]
        %v414 = vld [vmem:[%s347 + $0x1e0] sm:$0xff]
        %v415 = vld [vmem:[%s347 + $0x1e8] sm:$0xff]
        %v416 = vld [vmem:[%s347 + $0x1f0] sm:$0xff]
        %v417 = vld [vmem:[%s347 + $0x1f8] sm:$0xff]
        %v418 = vld [vmem:[%s1] sm:$0xff]
        %v419 = vld [vmem:[%s1 + $0x8] sm:$0xff]
        %v420 = vld [vmem:[%s1 + $0x10] sm:$0xff]
        %v421 = vld [vmem:[%s1 + $0x18] sm:$0xff]
        %v422 = vld [vmem:[%s2] sm:$0xff]
        %v423 = vld [vmem:[%s2 + $0x8] sm:$0xff]
        %v424 = vld [vmem:[%s2 + $0x10] sm:$0xff]
        %v425 = vld [vmem:[%s2 + $0x18] sm:$0xff]
        %v426 = vld [vmem:[%s3] sm:$0xff]
        %v427 = vld [vmem:[%s3 + $0x8] sm:$0xff]
        %v428 = vld [vmem:[%s3 + $0x10] sm:$0xff]
        %v429 = vld [vmem:[%s3 + $0x18] sm:$0xff]
        %v430 = vld [vmem:[%s4] sm:$0xff]
        %v431 = vld [vmem:[%s4 + $0x8] sm:$0xff]
        %v432 = vld [vmem:[%s4 + $0x10] sm:$0xff]
        %v433 = vld [vmem:[%s4 + $0x18] sm:$0xff]
        %v434 = vld [vmem:[%s5] sm:$0xff]
        %v435 = vld [vmem:[%s5 + $0x8] sm:$0xff]
        %v436 = vld [vmem:[%s5 + $0x10] sm:$0xff]
        %v437 = vld [vmem:[%s5 + $0x18] sm:$0xff]
        %v438 = vld [vmem:[%s6] sm:$0xff]
        %v439 = vld [vmem:[%s6 + $0x8] sm:$0xff]
        %v440 = vld [vmem:[%s6 + $0x10] sm:$0xff]
        %v441 = vld [vmem:[%s6 + $0x18] sm:$0xff]
        %v442 = vld [vmem:[%s7] sm:$0x3]
        %v443 = vld [vmem:[%s8] sm:$0x3]
        %445 = vset.pattern.permute.xlu0 0
        %446 = vperm.xlu0 %445, %v422
        %v447 = vpop.permute.xlu0 %446
        %450 = vset.pattern.permute.xlu0 0
        %451 = vperm.xlu0 %450, %v423
        %v452 = vpop.permute.xlu0 %451
        %455 = vset.pattern.permute.xlu0 0
        %456 = vperm.xlu0 %455, %v424
        %v457 = vpop.permute.xlu0 %456
        %460 = vset.pattern.permute.xlu0 0
        %461 = vperm.xlu0 %460, %v425
        %v462 = vpop.permute.xlu0 %461
        %vm464 = vcmask 39936
        %v466 = vsel %vm464, %v418, 0
        %v469 = vsel %vm464, %v419, 0
        %v472 = vsel %vm464, %v420, 0
        %v475 = vsel %vm464, %v421, 0
        %v478 = vsel %vm464, %v354, 0
        %v481 = vsel %vm464, %v355, 0
        %v484 = vsel %vm464, %v356, 0
        %v487 = vsel %vm464, %v357, 0
        %v490 = vsel %vm464, %v358, 0
        %v493 = vsel %vm464, %v359, 0
        %v496 = vsel %vm464, %v360, 0
        %v499 = vsel %vm464, %v361, 0
        %v502 = vsel %vm464, %v362, 0
        %v505 = vsel %vm464, %v363, 0
        %v508 = vsel %vm464, %v364, 0
        %v511 = vsel %vm464, %v365, 0
        %v514 = vsel %vm464, %v366, 0
        %v517 = vsel %vm464, %v367, 0
        %v520 = vsel %vm464, %v368, 0
        %v523 = vsel %vm464, %v369, 0
        %v526 = vsel %vm464, %v370, 0
        %v529 = vsel %vm464, %v371, 0
        %v532 = vsel %vm464, %v372, 0
        %v535 = vsel %vm464, %v373, 0
        %v538 = vsel %vm464, %v374, 0
        %v541 = vsel %vm464, %v375, 0
        %v544 = vsel %vm464, %v376, 0
        %v547 = vsel %vm464, %v377, 0
        %v550 = vsel %vm464, %v378, 0
        %v553 = vsel %vm464, %v379, 0
        %v556 = vsel %vm464, %v380, 0
        %v559 = vsel %vm464, %v381, 0
        %v562 = vsel %vm464, %v382, 0
        %v565 = vsel %vm464, %v383, 0
        %v568 = vsel %vm464, %v384, 0
        %v571 = vsel %vm464, %v385, 0
        %v574 = vsel %vm464, %v386, 0
        %v577 = vsel %vm464, %v387, 0
        %v580 = vsel %vm464, %v388, 0
        %v583 = vsel %vm464, %v389, 0
        %v586 = vsel %vm464, %v390, 0
        %v589 = vsel %vm464, %v391, 0
        %v592 = vsel %vm464, %v392, 0
        %v595 = vsel %vm464, %v393, 0
        %v598 = vsel %vm464, %v394, 0
        %v601 = vsel %vm464, %v395, 0
        %v604 = vsel %vm464, %v396, 0
        %v607 = vsel %vm464, %v397, 0
        %v610 = vsel %vm464, %v398, 0
        %v613 = vsel %vm464, %v399, 0
        %v616 = vsel %vm464, %v400, 0
        %v619 = vsel %vm464, %v401, 0
        %v622 = vsel %vm464, %v402, 0
        %v625 = vsel %vm464, %v403, 0
        %v628 = vsel %vm464, %v404, 0
        %v631 = vsel %vm464, %v405, 0
        %v634 = vsel %vm464, %v406, 0
        %v637 = vsel %vm464, %v407, 0
        %v640 = vsel %vm464, %v408, 0
        %v643 = vsel %vm464, %v409, 0
        %v646 = vsel %vm464, %v410, 0
        %v649 = vsel %vm464, %v411, 0
        %v652 = vsel %vm464, %v412, 0
        %v655 = vsel %vm464, %v413, 0
        %v658 = vsel %vm464, %v414, 0
        %v661 = vsel %vm464, %v415, 0
        %v664 = vsel %vm464, %v416, 0
        %v667 = vsel %vm464, %v417, 0
        %669 = vmatprep.subr.mxu0 0.0
        %670 = vmatpush1.xpose.msra.mxu0 %v478
        %671 = vmatprep.subr.mxu0 0.0
        %672 = vmatpush1.xpose.msra.mxu0 %v481
        %673 = vmatprep.subr.mxu0 0.0
        %674 = vmatpush1.xpose.msra.mxu0 %v484
        %675 = vmatprep.subr.mxu0 0.0
        %676 = vmatpush1.xpose.msra.mxu0 %v487
        %677 = vmatprep.subr.mxu0 0.0
        %678 = vmatpush1.xpose.msra.mxu0 %v490
        %679 = vmatprep.subr.mxu0 0.0
        %680 = vmatpush1.xpose.msra.mxu0 %v493
        %681 = vmatprep.subr.mxu0 0.0
        %682 = vmatpush1.xpose.msra.mxu0 %v496
        %683 = vmatprep.subr.mxu0 0.0
        %684 = vmatpush1.xpose.msra.mxu0 %v499
        %685 = vmatprep.subr.mxu0 0.0
        %686 = vmatpush1.xpose.msra.mxu0 %v502
        %687 = vmatprep.subr.mxu0 0.0
        %688 = vmatpush1.xpose.msra.mxu0 %v505
        %689 = vmatprep.subr.mxu0 0.0
        %690 = vmatpush1.xpose.msra.mxu0 %v508
        %691 = vmatprep.subr.mxu0 0.0
        %692 = vmatpush1.xpose.msra.mxu0 %v511
        %693 = vmatprep.subr.mxu0 0.0
        %694 = vmatpush1.xpose.msra.mxu0 %v514
        %695 = vmatprep.subr.mxu0 0.0
        %696 = vmatpush1.xpose.msra.mxu0 %v517
        %697 = vmatprep.subr.mxu0 0.0
        %698 = vmatpush1.xpose.msra.mxu0 %v520
        %699 = vmatprep.subr.mxu0 0.0
        %700 = vmatpush1.xpose.msra.mxu0 %v523
        %701 = vmatprep.subr.mxu0 0.0
        %702 = vmatpush1.xpose.msra.mxu0 %v526
        %703 = vmatprep.subr.mxu0 0.0
        %704 = vmatpush1.xpose.msra.mxu0 %v529
        %705 = vmatprep.subr.mxu0 0.0
        %706 = vmatpush1.xpose.msra.mxu0 %v532
        %707 = vmatprep.subr.mxu0 0.0
        %708 = vmatpush1.xpose.msra.mxu0 %v535
        %709 = vmatprep.subr.mxu0 0.0
        %710 = vmatpush1.xpose.msra.mxu0 %v538
        %711 = vmatprep.subr.mxu0 0.0
        %712 = vmatpush1.xpose.msra.mxu0 %v541
        %713 = vmatprep.subr.mxu0 0.0
        %714 = vmatpush1.xpose.msra.mxu0 %v544
        %715 = vmatprep.subr.mxu0 0.0
        %716 = vmatpush1.xpose.msra.mxu0 %v547
        %717 = vmatprep.subr.mxu0 0.0
        %718 = vmatpush1.xpose.msra.mxu0 %v550
        %719 = vmatprep.subr.mxu0 0.0
        %720 = vmatpush1.xpose.msra.mxu0 %v553
        %721 = vmatprep.subr.mxu0 0.0
        %722 = vmatpush1.xpose.msra.mxu0 %v556
        %723 = vmatprep.subr.mxu0 0.0
        %724 = vmatpush1.xpose.msra.mxu0 %v559
        %725 = vmatprep.subr.mxu0 0.0
        %726 = vmatpush1.xpose.msra.mxu0 %v562
        %727 = vmatprep.subr.mxu0 0.0
        %728 = vmatpush1.xpose.msra.mxu0 %v565
        %729 = vmatprep.subr.mxu0 0.0
        %730 = vmatpush1.xpose.msra.mxu0 %v568
        %731 = vmatprep.subr.mxu0 0.0
        %732 = vmatpush1.xpose.msra.mxu0 %v571
        %733 = vmatprep.mubr.f32.mxu0 0.0
        %734 = vmatmul.mubr.f32.gmra.mrb[0].mxu0 %v466
        %v735 = vpop.f32.mrb[0].mxu0
        %v736 = vadd.f32 %v447, %v735
        %v737 = vpop.f32.mrb[0].mxu0
        %v738 = vadd.f32 %v447, %v737
        %739 = vmatprep.mubr.f32.mxu0 0.0
        %740 = vmatmul.mubr.f32.gmra.mrb[0].mxu0 %v469
        %v741 = vpop.f32.mrb[0].mxu0
        %v742 = vadd.f32 %v452, %v741
        %v743 = vpop.f32.mrb[0].mxu0
        %v744 = vadd.f32 %v452, %v743
        %745 = vmatprep.mubr.f32.mxu0 0.0
        %746 = vmatmul.mubr.f32.gmra.mrb[0].mxu0 %v472
        %v747 = vpop.f32.mrb[0].mxu0
        %v748 = vadd.f32 %v457, %v747
        %v749 = vpop.f32.mrb[0].mxu0
        %v750 = vadd.f32 %v457, %v749
        %751 = vmatprep.mubr.f32.mxu0 0.0
        %752 = vmatmul.mubr.f32.gmra.mrb[0].mxu0 %v475
        %v753 = vpop.f32.mrb[0].mxu0
        %v754 = vadd.f32 %v462, %v753
        %v755 = vpop.f32.mrb[0].mxu0
        %v756 = vadd.f32 %v462, %v755
        %757 = vdwg.mxu0
        %758 = vmatprep.subr.mxu0 0.0
        %759 = vmatpush1.xpose.msra.mxu0 %v574
        %760 = vmatprep.subr.mxu0 0.0
        %761 = vmatpush1.xpose.msra.mxu0 %v577
        %762 = vmatprep.subr.mxu0 0.0
        %763 = vmatpush1.xpose.msra.mxu0 %v580
        %764 = vmatprep.subr.mxu0 0.0
        %765 = vmatpush1.xpose.msra.mxu0 %v583
        %766 = vmatprep.subr.mxu0 0.0
        %767 = vmatpush1.xpose.msra.mxu0 %v586
        %768 = vmatprep.subr.mxu0 0.0
        %769 = vmatpush1.xpose.msra.mxu0 %v589
        %770 = vmatprep.subr.mxu0 0.0
        %771 = vmatpush1.xpose.msra.mxu0 %v592
        %772 = vmatprep.subr.mxu0 0.0
        %773 = vmatpush1.xpose.msra.mxu0 %v595
        %774 = vmatprep.subr.mxu0 0.0
        %775 = vmatpush1.xpose.msra.mxu0 %v598
        %776 = vmatprep.subr.mxu0 0.0
        %777 = vmatpush1.xpose.msra.mxu0 %v601
        %778 = vmatprep.subr.mxu0 0.0
        %779 = vmatpush1.xpose.msra.mxu0 %v604
        %780 = vmatprep.subr.mxu0 0.0
        %781 = vmatpush1.xpose.msra.mxu0 %v607
        %782 = vmatprep.subr.mxu0 0.0
        %783 = vmatpush1.xpose.msra.mxu0 %v610
        %784 = vmatprep.subr.mxu0 0.0
        %785 = vmatpush1.xpose.msra.mxu0 %v613
        %786 = vmatprep.subr.mxu0 0.0
        %787 = vmatpush1.xpose.msra.mxu0 %v616
        %788 = vmatprep.subr.mxu0 0.0
        %789 = vmatpush1.xpose.msra.mxu0 %v619
        %790 = vmatprep.subr.mxu0 0.0
        %791 = vmatpush1.xpose.msra.mxu0 %v622
        %792 = vmatprep.subr.mxu0 0.0
        %793 = vmatpush1.xpose.msra.mxu0 %v625
        %794 = vmatprep.subr.mxu0 0.0
        %795 = vmatpush1.xpose.msra.mxu0 %v628
        %796 = vmatprep.subr.mxu0 0.0
        %797 = vmatpush1.xpose.msra.mxu0 %v631
        %798 = vmatprep.subr.mxu0 0.0
        %799 = vmatpush1.xpose.msra.mxu0 %v634
        %800 = vmatprep.subr.mxu0 0.0
        %801 = vmatpush1.xpose.msra.mxu0 %v637
        %802 = vmatprep.subr.mxu0 0.0
        %803 = vmatpush1.xpose.msra.mxu0 %v640
        %804 = vmatprep.subr.mxu0 0.0
        %805 = vmatpush1.xpose.msra.mxu0 %v643
        %806 = vmatprep.subr.mxu0 0.0
        %807 = vmatpush1.xpose.msra.mxu0 %v646
        %808 = vmatprep.subr.mxu0 0.0
        %809 = vmatpush1.xpose.msra.mxu0 %v649
        %810 = vmatprep.subr.mxu0 0.0
        %811 = vmatpush1.xpose.msra.mxu0 %v652
        %812 = vmatprep.subr.mxu0 0.0
        %813 = vmatpush1.xpose.msra.mxu0 %v655
        %814 = vmatprep.subr.mxu0 0.0
        %815 = vmatpush1.xpose.msra.mxu0 %v658
        %816 = vmatprep.subr.mxu0 0.0
        %817 = vmatpush1.xpose.msra.mxu0 %v661
        %818 = vmatprep.subr.mxu0 0.0
        %819 = vmatpush1.xpose.msra.mxu0 %v664
        %820 = vmatprep.subr.mxu0 0.0
        %821 = vmatpush1.xpose.msra.mxu0 %v667
        %822 = vmatprep.mubr.f32.mxu0 0.0
        %823 = vmatmul.mubr.f32.gmra.mrb[0].mxu0 %v466
        %v824 = vpop.f32.mrb[0].mxu0
        %v825 = vadd.f32 %v447, %v824
        %v826 = vpop.f32.mrb[0].mxu0
        %v827 = vadd.f32 %v447, %v826
        %828 = vmatprep.mubr.f32.mxu0 0.0
        %829 = vmatmul.mubr.f32.gmra.mrb[0].mxu0 %v469
        %v830 = vpop.f32.mrb[0].mxu0
        %v831 = vadd.f32 %v452, %v830
        %v832 = vpop.f32.mrb[0].mxu0
        %v833 = vadd.f32 %v452, %v832
        %834 = vmatprep.mubr.f32.mxu0 0.0
        %835 = vmatmul.mubr.f32.gmra.mrb[0].mxu0 %v472
        %v836 = vpop.f32.mrb[0].mxu0
        %v837 = vadd.f32 %v457, %v836
        %v838 = vpop.f32.mrb[0].mxu0
        %v839 = vadd.f32 %v457, %v838
        %840 = vmatprep.mubr.f32.mxu0 0.0
        %841 = vmatmul.mubr.f32.gmra.mrb[0].mxu0 %v475
        %v842 = vpop.f32.mrb[0].mxu0
        %v843 = vadd.f32 %v462, %v842
        %v844 = vpop.f32.mrb[0].mxu0
        %v845 = vadd.f32 %v462, %v844
        %846 = vdwg.mxu0
        %v847 = vtanh.pop %v736
        %v848 = vtanh.pop %v738
        %v849 = vtanh.pop %v825
        %v850 = vtanh.pop %v827
        %v851 = vtanh.pop %v742
        %v852 = vtanh.pop %v744
        %v853 = vtanh.pop %v831
        %v854 = vtanh.pop %v833
        %v855 = vtanh.pop %v748
        %v856 = vtanh.pop %v750
        %v857 = vtanh.pop %v837
        %v858 = vtanh.pop %v839
        %v859 = vtanh.pop %v754
        %v860 = vtanh.pop %v756
        %v861 = vtanh.pop %v843
        %v862 = vtanh.pop %v845
        %864 = vset.pattern.permute.xlu0 0
        %865 = vperm.xlu0 %864, %v430
        %v866 = vpop.permute.xlu0 %865
        %869 = vset.pattern.permute.xlu0 0
        %870 = vperm.xlu0 %869, %v431
        %v871 = vpop.permute.xlu0 %870
        %874 = vset.pattern.permute.xlu0 0
        %875 = vperm.xlu0 %874, %v432
        %v876 = vpop.permute.xlu0 %875
        %879 = vset.pattern.permute.xlu0 0
        %880 = vperm.xlu0 %879, %v433
        %v881 = vpop.permute.xlu0 %880
        %vm883 = vcmask 261120
        %v885 = vsel %vm883, %v426, 0
        %v888 = vsel %vm883, %v427, 0
        %v891 = vsel %vm883, %v428, 0
        %v894 = vsel %vm883, %v429, 0
        %896 = vmatprep.subr.mxu0 %v848
        %897 = vmatpush1.msra.mxu0 %v847
        %898 = vmatprep.subr.mxu0 %v852
        %899 = vmatpush1.msra.mxu0 %v851
        %900 = vmatprep.subr.mxu0 %v856
        %901 = vmatpush1.msra.mxu0 %v855
        %902 = vmatprep.subr.mxu0 %v860
        %903 = vmatpush1.msra.mxu0 %v859
        %904 = vmatprep.subr.mxu0 0.0
        %905 = vmatpush1.msra.mxu0 0.0
        %906 = vmatprep.subr.mxu0 0.0
        %907 = vmatpush1.msra.mxu0 0.0
        %908 = vmatprep.subr.mxu0 0.0
        %909 = vmatpush1.msra.mxu0 0.0
        %910 = vmatprep.subr.mxu0 0.0
        %911 = vmatpush1.msra.mxu0 0.0
        %912 = vmatprep.subr.mxu0 0.0
        %913 = vmatpush1.msra.mxu0 0.0
        %914 = vmatprep.subr.mxu0 0.0
        %915 = vmatpush1.msra.mxu0 0.0
        %916 = vmatprep.subr.mxu0 0.0
        %917 = vmatpush1.msra.mxu0 0.0
        %918 = vmatprep.subr.mxu0 0.0
        %919 = vmatpush1.msra.mxu0 0.0
        %920 = vmatprep.subr.mxu0 0.0
        %921 = vmatpush1.msra.mxu0 0.0
        %922 = vmatprep.subr.mxu0 0.0
        %923 = vmatpush1.msra.mxu0 0.0
        %924 = vmatprep.subr.mxu0 0.0
        %925 = vmatpush1.msra.mxu0 0.0
        %926 = vmatprep.subr.mxu0 0.0
        %927 = vmatpush1.msra.mxu0 0.0
        %928 = vmatprep.subr.mxu0 0.0
        %929 = vmatpush1.msra.mxu0 0.0
        %930 = vmatprep.subr.mxu0 0.0
        %931 = vmatpush1.msra.mxu0 0.0
        %932 = vmatprep.subr.mxu0 0.0
        %933 = vmatpush1.msra.mxu0 0.0
        %934 = vmatprep.subr.mxu0 0.0
        %935 = vmatpush1.msra.mxu0 0.0
        %936 = vmatprep.subr.mxu0 0.0
        %937 = vmatpush1.msra.mxu0 0.0
        %938 = vmatprep.subr.mxu0 0.0
        %939 = vmatpush1.msra.mxu0 0.0
        %940 = vmatprep.subr.mxu0 0.0
        %941 = vmatpush1.msra.mxu0 0.0
        %942 = vmatprep.subr.mxu0 0.0
        %943 = vmatpush1.msra.mxu0 0.0
        %944 = vmatprep.subr.mxu0 0.0
        %945 = vmatpush1.msra.mxu0 0.0
        %946 = vmatprep.subr.mxu0 0.0
        %947 = vmatpush1.msra.mxu0 0.0
        %948 = vmatprep.subr.mxu0 0.0
        %949 = vmatpush1.msra.mxu0 0.0
        %950 = vmatprep.subr.mxu0 0.0
        %951 = vmatpush1.msra.mxu0 0.0
        %952 = vmatprep.subr.mxu0 0.0
        %953 = vmatpush1.msra.mxu0 0.0
        %954 = vmatprep.subr.mxu0 0.0
        %955 = vmatpush1.msra.mxu0 0.0
        %956 = vmatprep.subr.mxu0 0.0
        %957 = vmatpush1.msra.mxu0 0.0
        %958 = vmatprep.subr.mxu0 0.0
        %959 = vmatpush1.msra.mxu0 0.0
        %960 = vmatprep.mubr.f32.mxu0 0.0
        %961 = vmatmul.mubr.f32.gmra.mrb[0].mxu0 %v885
        %v962 = vpop.f32.mrb[0].mxu0
        %v963 = vadd.f32 %v866, %v962
        %v964 = vpop.f32.mrb[0].mxu0
        %v965 = vadd.f32 %v866, %v964
        %966 = vmatprep.mubr.f32.mxu0 0.0
        %967 = vmatmul.mubr.f32.gmra.mrb[0].mxu0 %v888
        %v968 = vpop.f32.mrb[0].mxu0
        %v969 = vadd.f32 %v871, %v968
        %v970 = vpop.f32.mrb[0].mxu0
        %v971 = vadd.f32 %v871, %v970
        %972 = vmatprep.mubr.f32.mxu0 0.0
        %973 = vmatmul.mubr.f32.gmra.mrb[0].mxu0 %v891
        %v974 = vpop.f32.mrb[0].mxu0
        %v975 = vadd.f32 %v876, %v974
        %v976 = vpop.f32.mrb[0].mxu0
        %v977 = vadd.f32 %v876, %v976
        %978 = vmatprep.mubr.f32.mxu0 0.0
        %979 = vmatmul.mubr.f32.gmra.mrb[0].mxu0 %v894
        %v980 = vpop.f32.mrb[0].mxu0
        %v981 = vadd.f32 %v881, %v980
        %v982 = vpop.f32.mrb[0].mxu0
        %v983 = vadd.f32 %v881, %v982
        %984 = vdwg.mxu0
        %985 = vmatprep.subr.mxu0 %v850
        %986 = vmatpush1.msra.mxu0 %v849
        %987 = vmatprep.subr.mxu0 %v854
        %988 = vmatpush1.msra.mxu0 %v853
        %989 = vmatprep.subr.mxu0 %v858
        %990 = vmatpush1.msra.mxu0 %v857
        %991 = vmatprep.subr.mxu0 %v862
        %992 = vmatpush1.msra.mxu0 %v861
        %993 = vmatprep.subr.mxu0 0.0
        %994 = vmatpush1.msra.mxu0 0.0
        %995 = vmatprep.subr.mxu0 0.0
        %996 = vmatpush1.msra.mxu0 0.0
        %997 = vmatprep.subr.mxu0 0.0
        %998 = vmatpush1.msra.mxu0 0.0
        %999 = vmatprep.subr.mxu0 0.0
        %1000 = vmatpush1.msra.mxu0 0.0
        %1001 = vmatprep.subr.mxu0 0.0
        %1002 = vmatpush1.msra.mxu0 0.0
        %1003 = vmatprep.subr.mxu0 0.0
        %1004 = vmatpush1.msra.mxu0 0.0
        %1005 = vmatprep.subr.mxu0 0.0
        %1006 = vmatpush1.msra.mxu0 0.0
        %1007 = vmatprep.subr.mxu0 0.0
        %1008 = vmatpush1.msra.mxu0 0.0
        %1009 = vmatprep.subr.mxu0 0.0
        %1010 = vmatpush1.msra.mxu0 0.0
        %1011 = vmatprep.subr.mxu0 0.0
        %1012 = vmatpush1.msra.mxu0 0.0
        %1013 = vmatprep.subr.mxu0 0.0
        %1014 = vmatpush1.msra.mxu0 0.0
        %1015 = vmatprep.subr.mxu0 0.0
        %1016 = vmatpush1.msra.mxu0 0.0
        %1017 = vmatprep.subr.mxu0 0.0
        %1018 = vmatpush1.msra.mxu0 0.0
        %1019 = vmatprep.subr.mxu0 0.0
        %1020 = vmatpush1.msra.mxu0 0.0
        %1021 = vmatprep.subr.mxu0 0.0
        %1022 = vmatpush1.msra.mxu0 0.0
        %1023 = vmatprep.subr.mxu0 0.0
        %1024 = vmatpush1.msra.mxu0 0.0
        %1025 = vmatprep.subr.mxu0 0.0
        %1026 = vmatpush1.msra.mxu0 0.0
        %1027 = vmatprep.subr.mxu0 0.0
        %1028 = vmatpush1.msra.mxu0 0.0
        %1029 = vmatprep.subr.mxu0 0.0
        %1030 = vmatpush1.msra.mxu0 0.0
        %1031 = vmatprep.subr.mxu0 0.0
        %1032 = vmatpush1.msra.mxu0 0.0
        %1033 = vmatprep.subr.mxu0 0.0
        %1034 = vmatpush1.msra.mxu0 0.0
        %1035 = vmatprep.subr.mxu0 0.0
        %1036 = vmatpush1.msra.mxu0 0.0
        %1037 = vmatprep.subr.mxu0 0.0
        %1038 = vmatpush1.msra.mxu0 0.0
        %1039 = vmatprep.subr.mxu0 0.0
        %1040 = vmatpush1.msra.mxu0 0.0
        %1041 = vmatprep.subr.mxu0 0.0
        %1042 = vmatpush1.msra.mxu0 0.0
        %1043 = vmatprep.subr.mxu0 0.0
        %1044 = vmatpush1.msra.mxu0 0.0
        %1045 = vmatprep.subr.mxu0 0.0
        %1046 = vmatpush1.msra.mxu0 0.0
        %1047 = vmatprep.subr.mxu0 0.0
        %1048 = vmatpush1.msra.mxu0 0.0
        %1049 = vmatprep.mubr.f32.mxu0 0.0
        %1050 = vmatmul.mubr.f32.gmra.mrb[0].mxu0 %v885
        %v1051 = vpop.f32.mrb[0].mxu0
        %v1052 = vadd.f32 %v866, %v1051
        %v1053 = vpop.f32.mrb[0].mxu0
        %v1054 = vadd.f32 %v866, %v1053
        %1055 = vmatprep.mubr.f32.mxu0 0.0
        %1056 = vmatmul.mubr.f32.gmra.mrb[0].mxu0 %v888
        %v1057 = vpop.f32.mrb[0].mxu0
        %v1058 = vadd.f32 %v871, %v1057
        %v1059 = vpop.f32.mrb[0].mxu0
        %v1060 = vadd.f32 %v871, %v1059
        %1061 = vmatprep.mubr.f32.mxu0 0.0
        %1062 = vmatmul.mubr.f32.gmra.mrb[0].mxu0 %v891
        %v1063 = vpop.f32.mrb[0].mxu0
        %v1064 = vadd.f32 %v876, %v1063
        %v1065 = vpop.f32.mrb[0].mxu0
        %v1066 = vadd.f32 %v876, %v1065
        %1067 = vmatprep.mubr.f32.mxu0 0.0
        %1068 = vmatmul.mubr.f32.gmra.mrb[0].mxu0 %v894
        %v1069 = vpop.f32.mrb[0].mxu0
        %v1070 = vadd.f32 %v881, %v1069
        %v1071 = vpop.f32.mrb[0].mxu0
        %v1072 = vadd.f32 %v881, %v1071
        %1073 = vdwg.mxu0
        %v1074 = vtanh.pop %v963
        %v1075 = vtanh.pop %v965
        %v1076 = vtanh.pop %v1052
        %v1077 = vtanh.pop %v1054
        %v1078 = vtanh.pop %v969
        %v1079 = vtanh.pop %v971
        %v1080 = vtanh.pop %v1058
        %v1081 = vtanh.pop %v1060
        %v1082 = vtanh.pop %v975
        %v1083 = vtanh.pop %v977
        %v1084 = vtanh.pop %v1064
        %v1085 = vtanh.pop %v1066
        %v1086 = vtanh.pop %v981
        %v1087 = vtanh.pop %v983
        %v1088 = vtanh.pop %v1070
        %v1089 = vtanh.pop %v1072
        %1091 = vset.pattern.permute.xlu0 0
        %1092 = vperm.xlu0 %1091, %v438
        %v1093 = vpop.permute.xlu0 %1092
        %1096 = vset.pattern.permute.xlu0 0
        %1097 = vperm.xlu0 %1096, %v439
        %v1098 = vpop.permute.xlu0 %1097
        %1101 = vset.pattern.permute.xlu0 0
        %1102 = vperm.xlu0 %1101, %v440
        %v1103 = vpop.permute.xlu0 %1102
        %1106 = vset.pattern.permute.xlu0 0
        %1107 = vperm.xlu0 %1106, %v441
        %v1108 = vpop.permute.xlu0 %1107
        %v1111 = vsel %vm883, %v434, 0
        %v1114 = vsel %vm883, %v435, 0
        %v1117 = vsel %vm883, %v436, 0
        %v1120 = vsel %vm883, %v437, 0
        %1122 = vmatprep.subr.mxu0 %v1075
        %1123 = vmatpush1.msra.mxu0 %v1074
        %1124 = vmatprep.subr.mxu0 %v1079
        %1125 = vmatpush1.msra.mxu0 %v1078
        %1126 = vmatprep.subr.mxu0 %v1083
        %1127 = vmatpush1.msra.mxu0 %v1082
        %1128 = vmatprep.subr.mxu0 %v1087
        %1129 = vmatpush1.msra.mxu0 %v1086
        %1130 = vmatprep.subr.mxu0 0.0
        %1131 = vmatpush1.msra.mxu0 0.0
        %1132 = vmatprep.subr.mxu0 0.0
        %1133 = vmatpush1.msra.mxu0 0.0
        %1134 = vmatprep.subr.mxu0 0.0
        %1135 = vmatpush1.msra.mxu0 0.0
        %1136 = vmatprep.subr.mxu0 0.0
        %1137 = vmatpush1.msra.mxu0 0.0
        %1138 = vmatprep.subr.mxu0 0.0
        %1139 = vmatpush1.msra.mxu0 0.0
        %1140 = vmatprep.subr.mxu0 0.0
        %1141 = vmatpush1.msra.mxu0 0.0
        %1142 = vmatprep.subr.mxu0 0.0
        %1143 = vmatpush1.msra.mxu0 0.0
        %1144 = vmatprep.subr.mxu0 0.0
        %1145 = vmatpush1.msra.mxu0 0.0
        %1146 = vmatprep.subr.mxu0 0.0
        %1147 = vmatpush1.msra.mxu0 0.0
        %1148 = vmatprep.subr.mxu0 0.0
        %1149 = vmatpush1.msra.mxu0 0.0
        %1150 = vmatprep.subr.mxu0 0.0
        %1151 = vmatpush1.msra.mxu0 0.0
        %1152 = vmatprep.subr.mxu0 0.0
        %1153 = vmatpush1.msra.mxu0 0.0
        %1154 = vmatprep.subr.mxu0 0.0
        %1155 = vmatpush1.msra.mxu0 0.0
        %1156 = vmatprep.subr.mxu0 0.0
        %1157 = vmatpush1.msra.mxu0 0.0
        %1158 = vmatprep.subr.mxu0 0.0
        %1159 = vmatpush1.msra.mxu0 0.0
        %1160 = vmatprep.subr.mxu0 0.0
        %1161 = vmatpush1.msra.mxu0 0.0
        %1162 = vmatprep.subr.mxu0 0.0
        %1163 = vmatpush1.msra.mxu0 0.0
        %1164 = vmatprep.subr.mxu0 0.0
        %1165 = vmatpush1.msra.mxu0 0.0
        %1166 = vmatprep.subr.mxu0 0.0
        %1167 = vmatpush1.msra.mxu0 0.0
        %1168 = vmatprep.subr.mxu0 0.0
        %1169 = vmatpush1.msra.mxu0 0.0
        %1170 = vmatprep.subr.mxu0 0.0
        %1171 = vmatpush1.msra.mxu0 0.0
        %1172 = vmatprep.subr.mxu0 0.0
        %1173 = vmatpush1.msra.mxu0 0.0
        %1174 = vmatprep.subr.mxu0 0.0
        %1175 = vmatpush1.msra.mxu0 0.0
        %1176 = vmatprep.subr.mxu0 0.0
        %1177 = vmatpush1.msra.mxu0 0.0
        %1178 = vmatprep.subr.mxu0 0.0
        %1179 = vmatpush1.msra.mxu0 0.0
        %1180 = vmatprep.subr.mxu0 0.0
        %1181 = vmatpush1.msra.mxu0 0.0
        %1182 = vmatprep.subr.mxu0 0.0
        %1183 = vmatpush1.msra.mxu0 0.0
        %1184 = vmatprep.subr.mxu0 0.0
        %1185 = vmatpush1.msra.mxu0 0.0
        %1186 = vmatprep.mubr.f32.mxu0 0.0
        %1187 = vmatmul.mubr.f32.gmra.mrb[0].mxu0 %v1111
        %v1188 = vpop.f32.mrb[0].mxu0
        %v1189 = vadd.f32 %v1093, %v1188
        %v1190 = vpop.f32.mrb[0].mxu0
        %v1191 = vadd.f32 %v1093, %v1190
        %1192 = vmatprep.mubr.f32.mxu0 0.0
        %1193 = vmatmul.mubr.f32.gmra.mrb[0].mxu0 %v1114
        %v1194 = vpop.f32.mrb[0].mxu0
        %v1195 = vadd.f32 %v1098, %v1194
        %v1196 = vpop.f32.mrb[0].mxu0
        %v1197 = vadd.f32 %v1098, %v1196
        %1198 = vmatprep.mubr.f32.mxu0 0.0
        %1199 = vmatmul.mubr.f32.gmra.mrb[0].mxu0 %v1117
        %v1200 = vpop.f32.mrb[0].mxu0
        %v1201 = vadd.f32 %v1103, %v1200
        %v1202 = vpop.f32.mrb[0].mxu0
        %v1203 = vadd.f32 %v1103, %v1202
        %1204 = vmatprep.mubr.f32.mxu0 0.0
        %1205 = vmatmul.mubr.f32.gmra.mrb[0].mxu0 %v1120
        %v1206 = vpop.f32.mrb[0].mxu0
        %v1207 = vadd.f32 %v1108, %v1206
        %v1208 = vpop.f32.mrb[0].mxu0
        %v1209 = vadd.f32 %v1108, %v1208
        %1210 = vdwg.mxu0
        %1211 = vmatprep.subr.mxu0 %v1077
        %1212 = vmatpush1.msra.mxu0 %v1076
        %1213 = vmatprep.subr.mxu0 %v1081
        %1214 = vmatpush1.msra.mxu0 %v1080
        %1215 = vmatprep.subr.mxu0 %v1085
        %1216 = vmatpush1.msra.mxu0 %v1084
        %1217 = vmatprep.subr.mxu0 %v1089
        %1218 = vmatpush1.msra.mxu0 %v1088
        %1219 = vmatprep.subr.mxu0 0.0
        %1220 = vmatpush1.msra.mxu0 0.0
        %1221 = vmatprep.subr.mxu0 0.0
        %1222 = vmatpush1.msra.mxu0 0.0
        %1223 = vmatprep.subr.mxu0 0.0
        %1224 = vmatpush1.msra.mxu0 0.0
        %1225 = vmatprep.subr.mxu0 0.0
        %1226 = vmatpush1.msra.mxu0 0.0
        %1227 = vmatprep.subr.mxu0 0.0
        %1228 = vmatpush1.msra.mxu0 0.0
        %1229 = vmatprep.subr.mxu0 0.0
        %1230 = vmatpush1.msra.mxu0 0.0
        %1231 = vmatprep.subr.mxu0 0.0
        %1232 = vmatpush1.msra.mxu0 0.0
        %1233 = vmatprep.subr.mxu0 0.0
        %1234 = vmatpush1.msra.mxu0 0.0
        %1235 = vmatprep.subr.mxu0 0.0
        %1236 = vmatpush1.msra.mxu0 0.0
        %1237 = vmatprep.subr.mxu0 0.0
        %1238 = vmatpush1.msra.mxu0 0.0
        %1239 = vmatprep.subr.mxu0 0.0
        %1240 = vmatpush1.msra.mxu0 0.0
        %1241 = vmatprep.subr.mxu0 0.0
        %1242 = vmatpush1.msra.mxu0 0.0
        %1243 = vmatprep.subr.mxu0 0.0
        %1244 = vmatpush1.msra.mxu0 0.0
        %1245 = vmatprep.subr.mxu0 0.0
        %1246 = vmatpush1.msra.mxu0 0.0
        %1247 = vmatprep.subr.mxu0 0.0
        %1248 = vmatpush1.msra.mxu0 0.0
        %1249 = vmatprep.subr.mxu0 0.0
        %1250 = vmatpush1.msra.mxu0 0.0
        %1251 = vmatprep.subr.mxu0 0.0
        %1252 = vmatpush1.msra.mxu0 0.0
        %1253 = vmatprep.subr.mxu0 0.0
        %1254 = vmatpush1.msra.mxu0 0.0
        %1255 = vmatprep.subr.mxu0 0.0
        %1256 = vmatpush1.msra.mxu0 0.0
        %1257 = vmatprep.subr.mxu0 0.0
        %1258 = vmatpush1.msra.mxu0 0.0
        %1259 = vmatprep.subr.mxu0 0.0
        %1260 = vmatpush1.msra.mxu0 0.0
        %1261 = vmatprep.subr.mxu0 0.0
        %1262 = vmatpush1.msra.mxu0 0.0
        %1263 = vmatprep.subr.mxu0 0.0
        %1264 = vmatpush1.msra.mxu0 0.0
        %1265 = vmatprep.subr.mxu0 0.0
        %1266 = vmatpush1.msra.mxu0 0.0
        %1267 = vmatprep.subr.mxu0 0.0
        %1268 = vmatpush1.msra.mxu0 0.0
        %1269 = vmatprep.subr.mxu0 0.0
        %1270 = vmatpush1.msra.mxu0 0.0
        %1271 = vmatprep.subr.mxu0 0.0
        %1272 = vmatpush1.msra.mxu0 0.0
        %1273 = vmatprep.subr.mxu0 0.0
        %1274 = vmatpush1.msra.mxu0 0.0
        %1275 = vmatprep.mubr.f32.mxu0 0.0
        %1276 = vmatmul.mubr.f32.gmra.mrb[0].mxu0 %v1111
        %v1277 = vpop.f32.mrb[0].mxu0
        %v1278 = vadd.f32 %v1093, %v1277
        %v1279 = vpop.f32.mrb[0].mxu0
        %v1280 = vadd.f32 %v1093, %v1279
        %1281 = vmatprep.mubr.f32.mxu0 0.0
        %1282 = vmatmul.mubr.f32.gmra.mrb[0].mxu0 %v1114
        %v1283 = vpop.f32.mrb[0].mxu0
        %v1284 = vadd.f32 %v1098, %v1283
        %v1285 = vpop.f32.mrb[0].mxu0
        %v1286 = vadd.f32 %v1098, %v1285
        %1287 = vmatprep.mubr.f32.mxu0 0.0
        %1288 = vmatmul.mubr.f32.gmra.mrb[0].mxu0 %v1117
        %v1289 = vpop.f32.mrb[0].mxu0
        %v1290 = vadd.f32 %v1103, %v1289
        %v1291 = vpop.f32.mrb[0].mxu0
        %v1292 = vadd.f32 %v1103, %v1291
        %1293 = vmatprep.mubr.f32.mxu0 0.0
        %1294 = vmatmul.mubr.f32.gmra.mrb[0].mxu0 %v1120
        %v1295 = vpop.f32.mrb[0].mxu0
        %v1296 = vadd.f32 %v1108, %v1295
        %v1297 = vpop.f32.mrb[0].mxu0
        %v1298 = vadd.f32 %v1108, %v1297
        %1299 = vdwg.mxu0
        %v1300 = vtanh.pop %v1189
        %v1301 = vtanh.pop %v1191
        %v1302 = vtanh.pop %v1278
        %v1303 = vtanh.pop %v1280
        %v1304 = vtanh.pop %v1195
        %v1305 = vtanh.pop %v1197
        %v1306 = vtanh.pop %v1284
        %v1307 = vtanh.pop %v1286
        %v1308 = vtanh.pop %v1201
        %v1309 = vtanh.pop %v1203
        %v1310 = vtanh.pop %v1290
        %v1311 = vtanh.pop %v1292
        %v1312 = vtanh.pop %v1207
        %v1313 = vtanh.pop %v1209
        %v1314 = vtanh.pop %v1296
        %v1315 = vtanh.pop %v1298
        %1317 = vset.pattern.permute.xlu0 0
        %1318 = vperm.xlu0 %1317, %v443
        %v1319 = vpop.permute.xlu0 %1318
        %v1322 = vsel %vm883, %v442, 0
        %1324 = vmatprep.subr.mxu0 %v1301
        %1325 = vmatpush1.msra.mxu0 %v1300
        %1326 = vmatprep.subr.mxu0 %v1305
        %1327 = vmatpush1.msra.mxu0 %v1304
        %1328 = vmatprep.subr.mxu0 %v1309
        %1329 = vmatpush1.msra.mxu0 %v1308
        %1330 = vmatprep.subr.mxu0 %v1313
        %1331 = vmatpush1.msra.mxu0 %v1312
        %1332 = vmatprep.subr.mxu0 0.0
        %1333 = vmatpush1.msra.mxu0 0.0
        %1334 = vmatprep.subr.mxu0 0.0
        %1335 = vmatpush1.msra.mxu0 0.0
        %1336 = vmatprep.subr.mxu0 0.0
        %1337 = vmatpush1.msra.mxu0 0.0
        %1338 = vmatprep.subr.mxu0 0.0
        %1339 = vmatpush1.msra.mxu0 0.0
        %1340 = vmatprep.subr.mxu0 0.0
        %1341 = vmatpush1.msra.mxu0 0.0
        %1342 = vmatprep.subr.mxu0 0.0
        %1343 = vmatpush1.msra.mxu0 0.0
        %1344 = vmatprep.subr.mxu0 0.0
        %1345 = vmatpush1.msra.mxu0 0.0
        %1346 = vmatprep.subr.mxu0 0.0
        %1347 = vmatpush1.msra.mxu0 0.0
        %1348 = vmatprep.subr.mxu0 0.0
        %1349 = vmatpush1.msra.mxu0 0.0
        %1350 = vmatprep.subr.mxu0 0.0
        %1351 = vmatpush1.msra.mxu0 0.0
        %1352 = vmatprep.subr.mxu0 0.0
        %1353 = vmatpush1.msra.mxu0 0.0
        %1354 = vmatprep.subr.mxu0 0.0
        %1355 = vmatpush1.msra.mxu0 0.0
        %1356 = vmatprep.subr.mxu0 0.0
        %1357 = vmatpush1.msra.mxu0 0.0
        %1358 = vmatprep.subr.mxu0 0.0
        %1359 = vmatpush1.msra.mxu0 0.0
        %1360 = vmatprep.subr.mxu0 0.0
        %1361 = vmatpush1.msra.mxu0 0.0
        %1362 = vmatprep.subr.mxu0 0.0
        %1363 = vmatpush1.msra.mxu0 0.0
        %1364 = vmatprep.subr.mxu0 0.0
        %1365 = vmatpush1.msra.mxu0 0.0
        %1366 = vmatprep.subr.mxu0 0.0
        %1367 = vmatpush1.msra.mxu0 0.0
        %1368 = vmatprep.subr.mxu0 0.0
        %1369 = vmatpush1.msra.mxu0 0.0
        %1370 = vmatprep.subr.mxu0 0.0
        %1371 = vmatpush1.msra.mxu0 0.0
        %1372 = vmatprep.subr.mxu0 0.0
        %1373 = vmatpush1.msra.mxu0 0.0
        %1374 = vmatprep.subr.mxu0 0.0
        %1375 = vmatpush1.msra.mxu0 0.0
        %1376 = vmatprep.subr.mxu0 0.0
        %1377 = vmatpush1.msra.mxu0 0.0
        %1378 = vmatprep.subr.mxu0 0.0
        %1379 = vmatpush1.msra.mxu0 0.0
        %1380 = vmatprep.subr.mxu0 0.0
        %1381 = vmatpush1.msra.mxu0 0.0
        %1382 = vmatprep.subr.mxu0 0.0
        %1383 = vmatpush1.msra.mxu0 0.0
        %1384 = vmatprep.subr.mxu0 0.0
        %1385 = vmatpush1.msra.mxu0 0.0
        %1386 = vmatprep.subr.mxu0 0.0
        %1387 = vmatpush1.msra.mxu0 0.0
        %1388 = vmatprep.mubr.f32.mxu0 0.0
        %1389 = vmatmul.mubr.f32.gmra.mrb[0].mxu0 %v1322
        %v1390 = vpop.f32.mrb[0].mxu0
        %v1391 = vadd.f32 %v1319, %v1390
        %v1392 = vpop.f32.mrb[0].mxu0
        %v1393 = vadd.f32 %v1319, %v1392
        %1394 = vdwg.mxu0
        %1395 = vmatprep.subr.mxu0 %v1303
        %1396 = vmatpush1.msra.mxu0 %v1302
        %1397 = vmatprep.subr.mxu0 %v1307
        %1398 = vmatpush1.msra.mxu0 %v1306
        %1399 = vmatprep.subr.mxu0 %v1311
        %1400 = vmatpush1.msra.mxu0 %v1310
        %1401 = vmatprep.subr.mxu0 %v1315
        %1402 = vmatpush1.msra.mxu0 %v1314
        %1403 = vmatprep.subr.mxu0 0.0
        %1404 = vmatpush1.msra.mxu0 0.0
        %1405 = vmatprep.subr.mxu0 0.0
        %1406 = vmatpush1.msra.mxu0 0.0
        %1407 = vmatprep.subr.mxu0 0.0
        %1408 = vmatpush1.msra.mxu0 0.0
        %1409 = vmatprep.subr.mxu0 0.0
        %1410 = vmatpush1.msra.mxu0 0.0
        %1411 = vmatprep.subr.mxu0 0.0
        %1412 = vmatpush1.msra.mxu0 0.0
        %1413 = vmatprep.subr.mxu0 0.0
        %1414 = vmatpush1.msra.mxu0 0.0
        %1415 = vmatprep.subr.mxu0 0.0
        %1416 = vmatpush1.msra.mxu0 0.0
        %1417 = vmatprep.subr.mxu0 0.0
        %1418 = vmatpush1.msra.mxu0 0.0
        %1419 = vmatprep.subr.mxu0 0.0
        %1420 = vmatpush1.msra.mxu0 0.0
        %1421 = vmatprep.subr.mxu0 0.0
        %1422 = vmatpush1.msra.mxu0 0.0
        %1423 = vmatprep.subr.mxu0 0.0
        %1424 = vmatpush1.msra.mxu0 0.0
        %1425 = vmatprep.subr.mxu0 0.0
        %1426 = vmatpush1.msra.mxu0 0.0
        %1427 = vmatprep.subr.mxu0 0.0
        %1428 = vmatpush1.msra.mxu0 0.0
        %1429 = vmatprep.subr.mxu0 0.0
        %1430 = vmatpush1.msra.mxu0 0.0
        %1431 = vmatprep.subr.mxu0 0.0
        %1432 = vmatpush1.msra.mxu0 0.0
        %1433 = vmatprep.subr.mxu0 0.0
        %1434 = vmatpush1.msra.mxu0 0.0
        %1435 = vmatprep.subr.mxu0 0.0
        %1436 = vmatpush1.msra.mxu0 0.0
        %1437 = vmatprep.subr.mxu0 0.0
        %1438 = vmatpush1.msra.mxu0 0.0
        %1439 = vmatprep.subr.mxu0 0.0
        %1440 = vmatpush1.msra.mxu0 0.0
        %1441 = vmatprep.subr.mxu0 0.0
        %1442 = vmatpush1.msra.mxu0 0.0
        %1443 = vmatprep.subr.mxu0 0.0
        %1444 = vmatpush1.msra.mxu0 0.0
        %1445 = vmatprep.subr.mxu0 0.0
        %1446 = vmatpush1.msra.mxu0 0.0
        %1447 = vmatprep.subr.mxu0 0.0
        %1448 = vmatpush1.msra.mxu0 0.0
        %1449 = vmatprep.subr.mxu0 0.0
        %1450 = vmatpush1.msra.mxu0 0.0
        %1451 = vmatprep.subr.mxu0 0.0
        %1452 = vmatpush1.msra.mxu0 0.0
        %1453 = vmatprep.subr.mxu0 0.0
        %1454 = vmatpush1.msra.mxu0 0.0
        %1455 = vmatprep.subr.mxu0 0.0
        %1456 = vmatpush1.msra.mxu0 0.0
        %1457 = vmatprep.subr.mxu0 0.0
        %1458 = vmatpush1.msra.mxu0 0.0
        %1459 = vmatprep.mubr.f32.mxu0 0.0
        %1460 = vmatmul.mubr.f32.gmra.mrb[0].mxu0 %v1322
        %v1461 = vpop.f32.mrb[0].mxu0
        %v1462 = vadd.f32 %v1319, %v1461
        %v1463 = vpop.f32.mrb[0].mxu0
        %v1464 = vadd.f32 %v1319, %v1463
        %1465 = vdwg.mxu0
        %v1470 = vcombine.low %v1391, %v1393
        %v1471 = vcombine.low %v1462, %v1464
        %v1473 = vunpack.c.l.s4 1983009808
        %v1474 = vunpack.c.0.s8 %v1473
        %v1475 = vlaneseq
        %v1476 = vshrl.u32 %v1475, 7
        %v1477 = vsub.s32 %v1474, %v1476
        %v1478 = vrot.slane %v1470, %v1477
        %v1480 = vunpack.c.l.s4 1983009808
        %v1481 = vunpack.c.0.s8 %v1480
        %v1482 = vlaneseq
        %v1483 = vshrl.u32 %v1482, 7
        %v1484 = vsub.s32 %v1481, %v1483
        %v1485 = vrot.slane %v1471, %v1484
        %v1486 = vcombine.low %v1478, %v1485
        %1488 = vst [vmem:[%s338] sm:$0xff] %v1486
        %s1489 = sand.u32 %s225, 1
        %s1490 = scalar_lea.sflag [#allocation3], %s1489
        %s1491 = sand.u32 %s225, 1
        %s1492 = smul.addr %s1491, 8
        %s1493 = scalar_lea.vmem [#allocation2], %s1492
        // Predicated region
        $region57: #{_correction_call.1} parent=55 // pred_check
          %p1494 = pneg %p235
        $region58: #{_correction_call.1} parent=55 // pred_check_branch
          %1496 = sbr.rel (%p1494) target = $region60
        $region59: #{_correction_call.1} parent=55 // pred_region
          %s1497 = smul.u32 4, %s23
          %s1499 = ssub.s32 128, 128
          %1500 = vsyncadd %s1490, %s1499
          %s1501 = smul.addr %s1497, 32
          %s1502 = scalar_lea.hbm %s9, %s1501
          %s1504 = sshll.u32 %s1493, 4
          %s1505 = int_to_ptr.vmem [resolvable:$true] %s1504
          %1507 = dma.vmem_to_hbm [thread:$0]  %s1505, 128, %s1502, %s1490
        $region60: #{_correction_call.1} parent=55 // pred_fallthru
          _
      $region56: #{_correction_call.1} parent=5 // pred_fallthru
        _
      %p1508 = scmp.le.s32.totalorder 2, %s18
      // Predicated region
      $region61: #{_correction_call.1} parent=5 // pred_check
        %p1509 = pneg %p1508
      $region62: #{_correction_call.1} parent=5 // pred_check_branch
        %1511 = sbr.rel (%p1509) target = $region64
      $region63: #{_correction_call.1} parent=5 // pred_region
        %s1512 = ssub.s32 %s18, 2
        // Predicated region
        $region65: #{_correction_call.1} parent=63 // pred_check
          %p1513 = pneg %p241
        $region66: #{_correction_call.1} parent=63 // pred_check_branch
          %1515 = sbr.rel (%p1513) target = $region68
        $region67: #{_correction_call.1} parent=63 // pred_region
          %s1516 = sand.u32 %s226, 1
          %s1517 = scalar_lea.sflag [#allocation3], %s1516
          %s1518 = sand.u32 %s226, 1
          %s1519 = smul.addr %s1518, 8
          %s1520 = scalar_lea.vmem [#allocation2], %s1519
          %1521 = dma.done %s1517, 128
        $region68: #{_correction_call.1} parent=63 // pred_fallthru
          _
      $region64: #{_correction_call.1} parent=5 // pred_fallthru
        _
    $region6: #{_correction_call.1} parent=1 // loop_footer
      %s22 = sadd.s32 1, %s18
    $region7: #{_correction_call.1} parent=1 // loop_footer_branch
      %17 = sbr.rel target = $region3
    $region8: #{_correction_call.1} parent=1 // loop_exit
      _
    %1522 = vsyncpa [#allocation3], 1
    %s1523 = scalar_lea.sflag [#allocation3], 1
    %1524 = vsyncpa %s1523, 1

</llo_original>
